<compile_context>
chip_gen: v6e
topology: v6e:2x2x1
jax: 0.10.0
libtpu: 0.0.40
codegen_flags: <defaults>
</compile_context>

<pallas_src>
import functools

import numpy as np
import jax
import jax.numpy as jnp
from jax import lax
from jax.experimental import pallas as pl
from jax.experimental.pallas import tpu as pltpu

EPS = 1e-5          # PyTorch InstanceNorm2d default eps
NEG_SLOPE = 0.2     # LeakyReLU slope


def _round_up(x, m):
    return (x + m - 1) // m * m


def _tap_shifts_and_masks(H, W):
    """Static lane-roll amounts + 0/1 validity masks for the 9 taps of a
    3x3 conv (padding=1) on a row-major flattened (H*W,) spatial axis."""
    HW = H * W
    h = np.arange(H)[:, None]
    w = np.arange(W)[None, :]
    shifts, masks = [], []
    for kh in range(3):
        for kw in range(3):
            d = (kh - 1) * W + (kw - 1)          # flat offset of this tap
            shifts.append((-d) % HW)             # jnp.roll-style shift
            valid = ((h + kh - 1 >= 0) & (h + kh - 1 < H) &
                     (w + kw - 1 >= 0) & (w + kw - 1 < W))
            masks.append(valid.reshape(HW))
    return tuple(shifts), jnp.asarray(np.stack(masks), dtype=jnp.float32)


def _flatten_weight(w_oihw, cout_pad, cin_pad):
    """(Cout, Cin, 3, 3) torch layout -> (Cout_pad, 9*Cin_pad) with column
    index (kh*3+kw)*Cin_pad + cin; padded rows/columns are zero so they match
    the 8-aligned im2col slabs built in the kernel."""
    cout, cin = w_oihw.shape[0], w_oihw.shape[1]
    w = jnp.transpose(w_oihw, (0, 2, 3, 1)).reshape(cout, 9, cin)
    wf = jnp.zeros((cout_pad, 9, cin_pad), w.dtype).at[:cout, :, :cin].set(w)
    return wf.reshape(cout_pad, 9 * cin_pad)


def _pad_channels(v, cpad):
    return jnp.zeros((cpad,), v.dtype).at[: v.shape[0]].set(v)


def _vmem_capacity_bytes():
    """Physical VMEM of this chip (fallback 128 MiB if the query fails)."""
    try:
        info = pltpu.get_tpu_info()
        for attr in ("vmem_capacity_bytes", "vmem_size_bytes", "vmem_bytes"):
            val = getattr(info, attr, None)
            if val:
                return int(val)
    except Exception:
        pass
    return 128 * 1024 * 1024


def _conv_block_kernel(shifts, x_ref, w1_ref, w2_ref, prm_ref, mask_ref,
                       out_ref, p1_ref, p2_ref, y1_ref):
    """Fused (conv3x3 + InstanceNorm(affine) + LeakyReLU) x 2 for one
    sub-batch of N_b images.

    x_ref   : (N_b, Cin, HW)        channels-first, spatial flattened (lanes)
    w1_ref  : (Cout_pad, 9*Cin_pad) layer-1 weight, im2col layout (zero-padded)
    w2_ref  : (Cout_pad, 9*Cout_pad)
    prm_ref : (Cout_pad, 4)         columns = [g1, beta1, g2, beta2]
    mask_ref: (9, HW)               0/1 border masks per conv tap
    out_ref : (N_b, Cout, HW)
    p1_ref  : (9*Cin_pad,  N_b*HW)  f32 scratch (layer-1 im2col)
    p2_ref  : (9*Cout_pad, N_b*HW)  f32 scratch (layer-2 im2col)
    y1_ref  : (Cout_pad,   N_b*HW)  f32 scratch (layer-1 activations)
    """
    n_imgs, cin, hw = x_ref.shape
    cout_pad = w1_ref.shape[0]
    cin_pad = w1_ref.shape[1] // 9
    cout = out_ref.shape[1]
    inv_hw = 1.0 / hw

    def im2col(src, n, c_pad, p_ref):
        # 3x3 taps of image n: lane rolls (XLU slot) + 0/1 border masks,
        # stored at 8-aligned sublane / 128-aligned lane offsets (full tiles).
        for t, shift in enumerate(shifts):
            tap = src if shift == 0 else pltpu.roll(src, shift=shift, axis=1)
            p_ref[t * c_pad:(t + 1) * c_pad, n * hw:(n + 1) * hw] = \
                tap * mask_ref[t:t + 1, :]

    def norm_act(ys, gamma, beta):
        # InstanceNorm2d (biased variance), single-pass stats in f32.
        mean = jnp.sum(ys, axis=1, keepdims=True) * inv_hw
        ex2 = jnp.sum(ys * ys, axis=1, keepdims=True) * inv_hw
        var = jnp.maximum(ex2 - mean * mean, 0.0)      # guard cancellation
        z = (ys - mean) * lax.rsqrt(var + EPS)
        z = z * gamma + beta
        return jnp.where(z >= 0.0, z, NEG_SLOPE * z)   # LeakyReLU(0.2)

    g1, be1 = prm_ref[:, 0:1], prm_ref[:, 1:2]
    g2, be2 = prm_ref[:, 2:3], prm_ref[:, 3:4]

    # ---- layer-1 im2col (per image, channel-padded so stores are full) ----
    if cin_pad > cin:
        zpad = jnp.zeros((cin_pad - cin, hw), jnp.float32)
    for n in range(n_imgs):
        src = x_ref[n].astype(jnp.float32)
        if cin_pad > cin:
            src = jnp.concatenate([src, zpad], axis=0)
        im2col(src, n, cin_pad, p1_ref)

    # ---- layer 1: one MXU matmul for the whole sub-batch ------------------
    # Conv bias omitted: a per-channel constant is exactly removed by the
    # InstanceNorm mean subtraction.
    y1 = jnp.dot(w1_ref[...], p1_ref[...], preferred_element_type=jnp.float32)
    for n in range(n_imgs):
        y1_ref[:, n * hw:(n + 1) * hw] = \
            norm_act(y1[:, n * hw:(n + 1) * hw], g1, be1)
    # padded out-channels of y1 are exactly 0 (zero weight rows, gamma=beta=0)

    # ---- layer-2 im2col from the VMEM-resident layer-1 activations --------
    for n in range(n_imgs):
        im2col(y1_ref[:, n * hw:(n + 1) * hw], n, cout_pad, p2_ref)

    # ---- layer 2 matmul + InstanceNorm + LeakyReLU, lane-dense store ------
    y2 = jnp.dot(w2_ref[...], p2_ref[...], preferred_element_type=jnp.float32)
    for n in range(n_imgs):
        z = norm_act(y2[:, n * hw:(n + 1) * hw], g2, be2)
        out_ref[n] = z[:cout, :].astype(out_ref.dtype)


def conv_block_forward(x_nchw, params, images_per_step=None):
    """ConvBlock.forward — input/output are NCHW like the PyTorch module."""
    N, Cin, H, W = x_nchw.shape
    Cout = params["w1"].shape[0]
    HW = H * W
    cin_pad = _round_up(Cin, 8)
    cout_pad = _round_up(Cout, 8)

    vmem_cap = _vmem_capacity_bytes()

    if images_per_step is None:
        # Fold as many images per grid step as comfortably fit in VMEM:
        # amortizes per-step overhead and shares one MXU weight push.
        fixed = 4 * 9 * cout_pad * (cin_pad + cout_pad)              # weights
        per_img = 4 * HW * (9 * cin_pad + 9 * cout_pad + cout_pad    # scratch
                            + 2 * (Cin + Cout))                      # dbl-buf I/O
        budget = int(vmem_cap * 0.45)
        images_per_step = 1
        for nb in range(1, N + 1):
            if N % nb == 0 and fixed + nb * per_img <= budget:
                images_per_step = nb
    n_b = images_per_step
    assert N % n_b == 0, "images_per_step must divide the batch"
    # TODO(synk): on v7x with large N, cap n_b at N//2 so the batch grid axis
    # still shards across the two TensorCores.
    # TODO(synk): for production H*W / C (e.g. 128x128 @ C>=64) tile the HW
    # (lane) axis in multiples of 8*128 with a +-W halo (the roll+mask
    # machinery handles the halo) and finalize InstanceNorm from partial
    # sums, and/or accumulate per tap instead of materializing the 9x im2col,
    # so one block fits v7x's 64 MiB VMEM.

    x2d = x_nchw.reshape(N, Cin, HW).astype(jnp.float32)     # free reshape
    w1f = _flatten_weight(params["w1"], cout_pad, cin_pad)
    w2f = _flatten_weight(params["w2"], cout_pad, cout_pad)
    prm = jnp.stack([_pad_channels(params["g1"], cout_pad),
                     _pad_channels(params["beta1"], cout_pad),
                     _pad_channels(params["g2"], cout_pad),
                     _pad_channels(params["beta2"], cout_pad)], axis=1)
    shifts, masks = _tap_shifts_and_masks(H, W)

    lanes = n_b * HW
    cost = pl.CostEstimate(
        flops=int(2 * N * HW * 9 * cout_pad * (cin_pad + cout_pad)),
        transcendentals=int(2 * N * cout_pad),
        bytes_accessed=int(4 * (x2d.size + N * Cout * HW + w1f.size
                                + w2f.size + prm.size + masks.size)))

    out2d = pl.pallas_call(
        functools.partial(_conv_block_kernel, shifts),
        out_shape=jax.ShapeDtypeStruct((N, Cout, HW), jnp.float32),
        grid=(N // n_b,),
        in_specs=[
            pl.BlockSpec((n_b, Cin, HW), lambda g: (g, 0, 0)),
            pl.BlockSpec((cout_pad, 9 * cin_pad), lambda g: (0, 0)),
            pl.BlockSpec((cout_pad, 9 * cout_pad), lambda g: (0, 0)),
            pl.BlockSpec((cout_pad, 4), lambda g: (0, 0)),
            pl.BlockSpec((9, HW), lambda g: (0, 0)),
        ],
        out_specs=pl.BlockSpec((n_b, Cout, HW), lambda g: (g, 0, 0)),
        scratch_shapes=[
            pltpu.VMEM((9 * cin_pad, lanes), jnp.float32),
            pltpu.VMEM((9 * cout_pad, lanes), jnp.float32),
            pltpu.VMEM((cout_pad, lanes), jnp.float32),
        ],
        compiler_params=pltpu.CompilerParams(
            dimension_semantics=("parallel",),
            vmem_limit_bytes=min(vmem_cap * 3 // 4, 100 * 1024 * 1024)),
        cost_estimate=cost,
    )(x2d, w1f, w2f, prm, masks)

    return out2d.reshape(N, Cout, H, W)                      # free reshape


def init_params(key, dim_in, dim_out):
    """Deterministic synthetic parameters in PyTorch layouts (w: OIHW)."""
    ks = jax.random.split(key, 8)
    fan1 = dim_in * 9
    fan2 = dim_out * 9
    w1 = jax.random.uniform(ks[0], (dim_out, dim_in, 3, 3), jnp.float32,
                            -1.0, 1.0) / jnp.sqrt(fan1)
    b1 = jax.random.uniform(ks[1], (dim_out,), jnp.float32, -1.0, 1.0) / jnp.sqrt(fan1)
    w2 = jax.random.uniform(ks[2], (dim_out, dim_out, 3, 3), jnp.float32,
                            -1.0, 1.0) / jnp.sqrt(fan2)
    b2 = jax.random.uniform(ks[3], (dim_out,), jnp.float32, -1.0, 1.0) / jnp.sqrt(fan2)
    g1 = 1.0 + 0.1 * jax.random.uniform(ks[4], (dim_out,), jnp.float32, -1.0, 1.0)
    beta1 = 0.1 * jax.random.uniform(ks[5], (dim_out,), jnp.float32, -1.0, 1.0)
    g2 = 1.0 + 0.1 * jax.random.uniform(ks[6], (dim_out,), jnp.float32, -1.0, 1.0)
    beta2 = 0.1 * jax.random.uniform(ks[7], (dim_out,), jnp.float32, -1.0, 1.0)
    return {"w1": w1, "b1": b1, "g1": g1, "beta1": beta1,
            "w2": w2, "b2": b2, "g2": g2, "beta2": beta2}


def _reference_forward(x_nchw, params):
    """Pure-JAX reference (NCHW conv + bias + instance-norm + leaky-relu)."""
    def layer(x, w_oihw, b, g, beta):
        y = lax.conv_general_dilated(
            x, w_oihw, window_strides=(1, 1), padding=((1, 1), (1, 1)),
            dimension_numbers=("NCHW", "OIHW", "NCHW"))
        y = y + b[None, :, None, None]
        mean = jnp.mean(y, axis=(2, 3), keepdims=True)
        var = jnp.mean((y - mean) ** 2, axis=(2, 3), keepdims=True)
        y = (y - mean) * lax.rsqrt(var + EPS)
        y = y * g[None, :, None, None] + beta[None, :, None, None]
        return jnp.where(y >= 0, y, NEG_SLOPE * y)

    x = layer(x_nchw, params["w1"], params["b1"], params["g1"], params["beta1"])
    x = layer(x, params["w2"], params["b2"], params["g2"], params["beta2"])
    return x


if __name__ == "__main__":
    key = jax.random.PRNGKey(0)
    kx, kp = jax.random.split(key)

    N, C_IN, C_OUT, H, W = 2, 4, 8, 16, 16
    x = jax.random.normal(kx, (N, C_IN, H, W), jnp.float32)
    params = init_params(kp, C_IN, C_OUT)

    out = jax.block_until_ready(conv_block_forward(x, params))
    ref = jax.block_until_ready(_reference_forward(x, params))

    assert out.shape == (N, C_OUT, H, W)
    assert jnp.allclose(out, ref, rtol=1e-4, atol=1e-4), \
        "Pallas output mismatch vs reference"

    print("KERNEL_OK")
</pallas_src>

<mosaic_0001>
module attributes {stable_mosaic.version = 11 : i64} {
  func.func @_conv_block_kernel(%arg0: i32, %arg1: memref<2x4x256xf32, #tpu.memory_space<vmem>>, %arg2: memref<8x72xf32, #tpu.memory_space<vmem>>, %arg3: memref<8x72xf32, #tpu.memory_space<vmem>>, %arg4: memref<8x4xf32, #tpu.memory_space<vmem>>, %arg5: memref<9x256xf32, #tpu.memory_space<vmem>>, %arg6: memref<2x8x256xf32, #tpu.memory_space<vmem>>, %arg7: memref<72x512xf32, #tpu.memory_space<vmem>>, %arg8: memref<72x512xf32, #tpu.memory_space<vmem>>, %arg9: memref<8x512xf32, #tpu.memory_space<vmem>>) attributes {dimension_semantics = [#tpu.dimension_semantics<parallel>], iteration_bounds = array<i64: 1>, scalar_prefetch = 0 : i64, scratch_operands = 3 : i64, tpu.core_type = #tpu.core_type<tc>, window_params = [{transform_indices = @transform_0, window_bounds = array<i64: 2, 4, 256>}, {pipeline_mode = #tpu.pipeline_mode<synchronous>, transform_indices = @transform_1, window_bounds = array<i64: 8, 72>}, {pipeline_mode = #tpu.pipeline_mode<synchronous>, transform_indices = @transform_2, window_bounds = array<i64: 8, 72>}, {pipeline_mode = #tpu.pipeline_mode<synchronous>, transform_indices = @transform_3, window_bounds = array<i64: 8, 4>}, {pipeline_mode = #tpu.pipeline_mode<synchronous>, transform_indices = @transform_4, window_bounds = array<i64: 9, 256>}, {transform_indices = @transform_5, window_bounds = array<i64: 2, 8, 256>}]} {
    %c0 = arith.constant 0 : index
    %c0_0 = arith.constant 0 : index
    %0 = vector.load %arg4[%c0, %c0_0] : memref<8x4xf32, #tpu.memory_space<vmem>>, vector<8x1xf32>
    %c0_1 = arith.constant 0 : index
    %c1 = arith.constant 1 : index
    %1 = vector.load %arg4[%c0_1, %c1] : memref<8x4xf32, #tpu.memory_space<vmem>>, vector<8x1xf32>
    %c0_2 = arith.constant 0 : index
    %c2 = arith.constant 2 : index
    %2 = vector.load %arg4[%c0_2, %c2] : memref<8x4xf32, #tpu.memory_space<vmem>>, vector<8x1xf32>
    %c0_3 = arith.constant 0 : index
    %c3 = arith.constant 3 : index
    %3 = vector.load %arg4[%c0_3, %c3] : memref<8x4xf32, #tpu.memory_space<vmem>>, vector<8x1xf32>
    %cst = arith.constant 0.000000e+00 : f32
    %4 = vector.broadcast %cst : f32 to vector<4x256xf32>
    %c0_4 = arith.constant 0 : index
    %c0_5 = arith.constant 0 : index
    %c0_6 = arith.constant 0 : index
    %5 = vector.load %arg1[%c0_4, %c0_5, %c0_6] : memref<2x4x256xf32, #tpu.memory_space<vmem>>, vector<1x4x256xf32>
    %6 = vector.shape_cast %5 : vector<1x4x256xf32> to vector<4x256xf32>
    %7 = tpu.concatenate %6, %4 in 0 : vector<4x256xf32>, vector<4x256xf32> -> vector<8x256xf32>
    %c17_i32 = arith.constant 17 : i32
    %8 = tpu.dynamic_rotate %7 by %c17_i32 dim 1 : vector<8x256xf32>, i32 -> vector<8x256xf32>
    %c0_7 = arith.constant 0 : index
    %c0_8 = arith.constant 0 : index
    %9 = vector.load %arg5[%c0_7, %c0_8] : memref<9x256xf32, #tpu.memory_space<vmem>>, vector<1x256xf32>
    %10 = vector.broadcast %9 : vector<1x256xf32> to vector<8x256xf32>
    %11 = arith.mulf %8, %10 : vector<8x256xf32>
    %c0_9 = arith.constant 0 : index
    %c0_10 = arith.constant 0 : index
    %12 = vector.load %arg7[%c0_9, %c0_10] : memref<72x512xf32, #tpu.memory_space<vmem>>, vector<8x256xf32>
    tpu.vector_store %arg7[%c0_9, %c0_10], %11 {strides = array<i32>} : memref<72x512xf32, #tpu.memory_space<vmem>>, vector<8x256xf32>,
    %c16_i32 = arith.constant 16 : i32
    %13 = tpu.dynamic_rotate %7 by %c16_i32 dim 1 : vector<8x256xf32>, i32 -> vector<8x256xf32>
    %c1_11 = arith.constant 1 : index
    %c0_12 = arith.constant 0 : index
    %14 = vector.load %arg5[%c1_11, %c0_12] : memref<9x256xf32, #tpu.memory_space<vmem>>, vector<1x256xf32>
    %15 = vector.broadcast %14 : vector<1x256xf32> to vector<8x256xf32>
    %16 = arith.mulf %13, %15 : vector<8x256xf32>
    %c8 = arith.constant 8 : index
    %c0_13 = arith.constant 0 : index
    %17 = vector.load %arg7[%c8, %c0_13] : memref<72x512xf32, #tpu.memory_space<vmem>>, vector<8x256xf32>
    tpu.vector_store %arg7[%c8, %c0_13], %16 {strides = array<i32>} : memref<72x512xf32, #tpu.memory_space<vmem>>, vector<8x256xf32>,
    %c15_i32 = arith.constant 15 : i32
    %18 = tpu.dynamic_rotate %7 by %c15_i32 dim 1 : vector<8x256xf32>, i32 -> vector<8x256xf32>
    %c2_14 = arith.constant 2 : index
    %c0_15 = arith.constant 0 : index
    %19 = vector.load %arg5[%c2_14, %c0_15] : memref<9x256xf32, #tpu.memory_space<vmem>>, vector<1x256xf32>
    %20 = vector.broadcast %19 : vector<1x256xf32> to vector<8x256xf32>
    %21 = arith.mulf %18, %20 : vector<8x256xf32>
    %c16 = arith.constant 16 : index
    %c0_16 = arith.constant 0 : index
    %22 = vector.load %arg7[%c16, %c0_16] : memref<72x512xf32, #tpu.memory_space<vmem>>, vector<8x256xf32>
    tpu.vector_store %arg7[%c16, %c0_16], %21 {strides = array<i32>} : memref<72x512xf32, #tpu.memory_space<vmem>>, vector<8x256xf32>,
    %c1_i32 = arith.constant 1 : i32
    %23 = tpu.dynamic_rotate %7 by %c1_i32 dim 1 : vector<8x256xf32>, i32 -> vector<8x256xf32>
    %c3_17 = arith.constant 3 : index
    %c0_18 = arith.constant 0 : index
    %24 = vector.load %arg5[%c3_17, %c0_18] : memref<9x256xf32, #tpu.memory_space<vmem>>, vector<1x256xf32>
    %25 = vector.broadcast %24 : vector<1x256xf32> to vector<8x256xf32>
    %26 = arith.mulf %23, %25 : vector<8x256xf32>
    %c24 = arith.constant 24 : index
    %c0_19 = arith.constant 0 : index
    %27 = vector.load %arg7[%c24, %c0_19] : memref<72x512xf32, #tpu.memory_space<vmem>>, vector<8x256xf32>
    tpu.vector_store %arg7[%c24, %c0_19], %26 {strides = array<i32>} : memref<72x512xf32, #tpu.memory_space<vmem>>, vector<8x256xf32>,
    %c4 = arith.constant 4 : index
    %c0_20 = arith.constant 0 : index
    %28 = vector.load %arg5[%c4, %c0_20] : memref<9x256xf32, #tpu.memory_space<vmem>>, vector<1x256xf32>
    %29 = vector.broadcast %28 : vector<1x256xf32> to vector<8x256xf32>
    %30 = arith.mulf %7, %29 : vector<8x256xf32>
    %c32 = arith.constant 32 : index
    %c0_21 = arith.constant 0 : index
    %31 = vector.load %arg7[%c32, %c0_21] : memref<72x512xf32, #tpu.memory_space<vmem>>, vector<8x256xf32>
    tpu.vector_store %arg7[%c32, %c0_21], %30 {strides = array<i32>} : memref<72x512xf32, #tpu.memory_space<vmem>>, vector<8x256xf32>,
    %c255_i32 = arith.constant 255 : i32
    %32 = tpu.dynamic_rotate %7 by %c255_i32 dim 1 : vector<8x256xf32>, i32 -> vector<8x256xf32>
    %c5 = arith.constant 5 : index
    %c0_22 = arith.constant 0 : index
    %33 = vector.load %arg5[%c5, %c0_22] : memref<9x256xf32, #tpu.memory_space<vmem>>, vector<1x256xf32>
    %34 = vector.broadcast %33 : vector<1x256xf32> to vector<8x256xf32>
    %35 = arith.mulf %32, %34 : vector<8x256xf32>
    %c40 = arith.constant 40 : index
    %c0_23 = arith.constant 0 : index
    %36 = vector.load %arg7[%c40, %c0_23] : memref<72x512xf32, #tpu.memory_space<vmem>>, vector<8x256xf32>
    tpu.vector_store %arg7[%c40, %c0_23], %35 {strides = array<i32>} : memref<72x512xf32, #tpu.memory_space<vmem>>, vector<8x256xf32>,
    %c241_i32 = arith.constant 241 : i32
    %37 = tpu.dynamic_rotate %7 by %c241_i32 dim 1 : vector<8x256xf32>, i32 -> vector<8x256xf32>
    %c6 = arith.constant 6 : index
    %c0_24 = arith.constant 0 : index
    %38 = vector.load %arg5[%c6, %c0_24] : memref<9x256xf32, #tpu.memory_space<vmem>>, vector<1x256xf32>
    %39 = vector.broadcast %38 : vector<1x256xf32> to vector<8x256xf32>
    %40 = arith.mulf %37, %39 : vector<8x256xf32>
    %c48 = arith.constant 48 : index
    %c0_25 = arith.constant 0 : index
    %41 = vector.load %arg7[%c48, %c0_25] : memref<72x512xf32, #tpu.memory_space<vmem>>, vector<8x256xf32>
    tpu.vector_store %arg7[%c48, %c0_25], %40 {strides = array<i32>} : memref<72x512xf32, #tpu.memory_space<vmem>>, vector<8x256xf32>,
    %c240_i32 = arith.constant 240 : i32
    %42 = tpu.dynamic_rotate %7 by %c240_i32 dim 1 : vector<8x256xf32>, i32 -> vector<8x256xf32>
    %c7 = arith.constant 7 : index
    %c0_26 = arith.constant 0 : index
    %43 = vector.load %arg5[%c7, %c0_26] : memref<9x256xf32, #tpu.memory_space<vmem>>, vector<1x256xf32>
    %44 = vector.broadcast %43 : vector<1x256xf32> to vector<8x256xf32>
    %45 = arith.mulf %42, %44 : vector<8x256xf32>
    %c56 = arith.constant 56 : index
    %c0_27 = arith.constant 0 : index
    %46 = vector.load %arg7[%c56, %c0_27] : memref<72x512xf32, #tpu.memory_space<vmem>>, vector<8x256xf32>
    tpu.vector_store %arg7[%c56, %c0_27], %45 {strides = array<i32>} : memref<72x512xf32, #tpu.memory_space<vmem>>, vector<8x256xf32>,
    %c239_i32 = arith.constant 239 : i32
    %47 = tpu.dynamic_rotate %7 by %c239_i32 dim 1 : vector<8x256xf32>, i32 -> vector<8x256xf32>
    %c8_28 = arith.constant 8 : index
    %c0_29 = arith.constant 0 : index
    %48 = vector.load %arg5[%c8_28, %c0_29] : memref<9x256xf32, #tpu.memory_space<vmem>>, vector<1x256xf32>
    %49 = vector.broadcast %48 : vector<1x256xf32> to vector<8x256xf32>
    %50 = arith.mulf %47, %49 : vector<8x256xf32>
    %c64 = arith.constant 64 : index
    %c0_30 = arith.constant 0 : index
    %51 = vector.load %arg7[%c64, %c0_30] : memref<72x512xf32, #tpu.memory_space<vmem>>, vector<8x256xf32>
    tpu.vector_store %arg7[%c64, %c0_30], %50 {strides = array<i32>} : memref<72x512xf32, #tpu.memory_space<vmem>>, vector<8x256xf32>,
    %c1_31 = arith.constant 1 : index
    %c0_32 = arith.constant 0 : index
    %c0_33 = arith.constant 0 : index
    %52 = vector.load %arg1[%c1_31, %c0_32, %c0_33] : memref<2x4x256xf32, #tpu.memory_space<vmem>>, vector<1x4x256xf32>
    %53 = vector.shape_cast %52 : vector<1x4x256xf32> to vector<4x256xf32>
    %54 = tpu.concatenate %53, %4 in 0 : vector<4x256xf32>, vector<4x256xf32> -> vector<8x256xf32>
    %c17_i32_34 = arith.constant 17 : i32
    %55 = tpu.dynamic_rotate %54 by %c17_i32_34 dim 1 : vector<8x256xf32>, i32 -> vector<8x256xf32>
    %c0_35 = arith.constant 0 : index
    %c0_36 = arith.constant 0 : index
    %56 = vector.load %arg5[%c0_35, %c0_36] : memref<9x256xf32, #tpu.memory_space<vmem>>, vector<1x256xf32>
    %57 = vector.broadcast %56 : vector<1x256xf32> to vector<8x256xf32>
    %58 = arith.mulf %55, %57 : vector<8x256xf32>
    %c0_37 = arith.constant 0 : index
    %c256 = arith.constant 256 : index
    %59 = vector.load %arg7[%c0_37, %c256] : memref<72x512xf32, #tpu.memory_space<vmem>>, vector<8x256xf32>
    tpu.vector_store %arg7[%c0_37, %c256], %58 {strides = array<i32>} : memref<72x512xf32, #tpu.memory_space<vmem>>, vector<8x256xf32>,
    %c16_i32_38 = arith.constant 16 : i32
    %60 = tpu.dynamic_rotate %54 by %c16_i32_38 dim 1 : vector<8x256xf32>, i32 -> vector<8x256xf32>
    %c1_39 = arith.constant 1 : index
    %c0_40 = arith.constant 0 : index
    %61 = vector.load %arg5[%c1_39, %c0_40] : memref<9x256xf32, #tpu.memory_space<vmem>>, vector<1x256xf32>
    %62 = vector.broadcast %61 : vector<1x256xf32> to vector<8x256xf32>
    %63 = arith.mulf %60, %62 : vector<8x256xf32>
    %c8_41 = arith.constant 8 : index
    %c256_42 = arith.constant 256 : index
    %64 = vector.load %arg7[%c8_41, %c256_42] : memref<72x512xf32, #tpu.memory_space<vmem>>, vector<8x256xf32>
    tpu.vector_store %arg7[%c8_41, %c256_42], %63 {strides = array<i32>} : memref<72x512xf32, #tpu.memory_space<vmem>>, vector<8x256xf32>,
    %c15_i32_43 = arith.constant 15 : i32
    %65 = tpu.dynamic_rotate %54 by %c15_i32_43 dim 1 : vector<8x256xf32>, i32 -> vector<8x256xf32>
    %c2_44 = arith.constant 2 : index
    %c0_45 = arith.constant 0 : index
    %66 = vector.load %arg5[%c2_44, %c0_45] : memref<9x256xf32, #tpu.memory_space<vmem>>, vector<1x256xf32>
    %67 = vector.broadcast %66 : vector<1x256xf32> to vector<8x256xf32>
    %68 = arith.mulf %65, %67 : vector<8x256xf32>
    %c16_46 = arith.constant 16 : index
    %c256_47 = arith.constant 256 : index
    %69 = vector.load %arg7[%c16_46, %c256_47] : memref<72x512xf32, #tpu.memory_space<vmem>>, vector<8x256xf32>
    tpu.vector_store %arg7[%c16_46, %c256_47], %68 {strides = array<i32>} : memref<72x512xf32, #tpu.memory_space<vmem>>, vector<8x256xf32>,
    %c1_i32_48 = arith.constant 1 : i32
    %70 = tpu.dynamic_rotate %54 by %c1_i32_48 dim 1 : vector<8x256xf32>, i32 -> vector<8x256xf32>
    %c3_49 = arith.constant 3 : index
    %c0_50 = arith.constant 0 : index
    %71 = vector.load %arg5[%c3_49, %c0_50] : memref<9x256xf32, #tpu.memory_space<vmem>>, vector<1x256xf32>
    %72 = vector.broadcast %71 : vector<1x256xf32> to vector<8x256xf32>
    %73 = arith.mulf %70, %72 : vector<8x256xf32>
    %c24_51 = arith.constant 24 : index
    %c256_52 = arith.constant 256 : index
    %74 = vector.load %arg7[%c24_51, %c256_52] : memref<72x512xf32, #tpu.memory_space<vmem>>, vector<8x256xf32>
    tpu.vector_store %arg7[%c24_51, %c256_52], %73 {strides = array<i32>} : memref<72x512xf32, #tpu.memory_space<vmem>>, vector<8x256xf32>,
    %c4_53 = arith.constant 4 : index
    %c0_54 = arith.constant 0 : index
    %75 = vector.load %arg5[%c4_53, %c0_54] : memref<9x256xf32, #tpu.memory_space<vmem>>, vector<1x256xf32>
    %76 = vector.broadcast %75 : vector<1x256xf32> to vector<8x256xf32>
    %77 = arith.mulf %54, %76 : vector<8x256xf32>
    %c32_55 = arith.constant 32 : index
    %c256_56 = arith.constant 256 : index
    %78 = vector.load %arg7[%c32_55, %c256_56] : memref<72x512xf32, #tpu.memory_space<vmem>>, vector<8x256xf32>
    tpu.vector_store %arg7[%c32_55, %c256_56], %77 {strides = array<i32>} : memref<72x512xf32, #tpu.memory_space<vmem>>, vector<8x256xf32>,
    %c255_i32_57 = arith.constant 255 : i32
    %79 = tpu.dynamic_rotate %54 by %c255_i32_57 dim 1 : vector<8x256xf32>, i32 -> vector<8x256xf32>
    %c5_58 = arith.constant 5 : index
    %c0_59 = arith.constant 0 : index
    %80 = vector.load %arg5[%c5_58, %c0_59] : memref<9x256xf32, #tpu.memory_space<vmem>>, vector<1x256xf32>
    %81 = vector.broadcast %80 : vector<1x256xf32> to vector<8x256xf32>
    %82 = arith.mulf %79, %81 : vector<8x256xf32>
    %c40_60 = arith.constant 40 : index
    %c256_61 = arith.constant 256 : index
    %83 = vector.load %arg7[%c40_60, %c256_61] : memref<72x512xf32, #tpu.memory_space<vmem>>, vector<8x256xf32>
    tpu.vector_store %arg7[%c40_60, %c256_61], %82 {strides = array<i32>} : memref<72x512xf32, #tpu.memory_space<vmem>>, vector<8x256xf32>,
    %c241_i32_62 = arith.constant 241 : i32
    %84 = tpu.dynamic_rotate %54 by %c241_i32_62 dim 1 : vector<8x256xf32>, i32 -> vector<8x256xf32>
    %c6_63 = arith.constant 6 : index
    %c0_64 = arith.constant 0 : index
    %85 = vector.load %arg5[%c6_63, %c0_64] : memref<9x256xf32, #tpu.memory_space<vmem>>, vector<1x256xf32>
    %86 = vector.broadcast %85 : vector<1x256xf32> to vector<8x256xf32>
    %87 = arith.mulf %84, %86 : vector<8x256xf32>
    %c48_65 = arith.constant 48 : index
    %c256_66 = arith.constant 256 : index
    %88 = vector.load %arg7[%c48_65, %c256_66] : memref<72x512xf32, #tpu.memory_space<vmem>>, vector<8x256xf32>
    tpu.vector_store %arg7[%c48_65, %c256_66], %87 {strides = array<i32>} : memref<72x512xf32, #tpu.memory_space<vmem>>, vector<8x256xf32>,
    %c240_i32_67 = arith.constant 240 : i32
    %89 = tpu.dynamic_rotate %54 by %c240_i32_67 dim 1 : vector<8x256xf32>, i32 -> vector<8x256xf32>
    %c7_68 = arith.constant 7 : index
    %c0_69 = arith.constant 0 : index
    %90 = vector.load %arg5[%c7_68, %c0_69] : memref<9x256xf32, #tpu.memory_space<vmem>>, vector<1x256xf32>
    %91 = vector.broadcast %90 : vector<1x256xf32> to vector<8x256xf32>
    %92 = arith.mulf %89, %91 : vector<8x256xf32>
    %c56_70 = arith.constant 56 : index
    %c256_71 = arith.constant 256 : index
    %93 = vector.load %arg7[%c56_70, %c256_71] : memref<72x512xf32, #tpu.memory_space<vmem>>, vector<8x256xf32>
    tpu.vector_store %arg7[%c56_70, %c256_71], %92 {strides = array<i32>} : memref<72x512xf32, #tpu.memory_space<vmem>>, vector<8x256xf32>,
    %c239_i32_72 = arith.constant 239 : i32
    %94 = tpu.dynamic_rotate %54 by %c239_i32_72 dim 1 : vector<8x256xf32>, i32 -> vector<8x256xf32>
    %c8_73 = arith.constant 8 : index
    %c0_74 = arith.constant 0 : index
    %95 = vector.load %arg5[%c8_73, %c0_74] : memref<9x256xf32, #tpu.memory_space<vmem>>, vector<1x256xf32>
    %96 = vector.broadcast %95 : vector<1x256xf32> to vector<8x256xf32>
    %97 = arith.mulf %94, %96 : vector<8x256xf32>
    %c64_75 = arith.constant 64 : index
    %c256_76 = arith.constant 256 : index
    %98 = vector.load %arg7[%c64_75, %c256_76] : memref<72x512xf32, #tpu.memory_space<vmem>>, vector<8x256xf32>
    tpu.vector_store %arg7[%c64_75, %c256_76], %97 {strides = array<i32>} : memref<72x512xf32, #tpu.memory_space<vmem>>, vector<8x256xf32>,
    %c0_77 = arith.constant 0 : index
    %c0_78 = arith.constant 0 : index
    %99 = vector.load %arg2[%c0_77, %c0_78] : memref<8x72xf32, #tpu.memory_space<vmem>>, vector<8x72xf32>
    %c0_79 = arith.constant 0 : index
    %c0_80 = arith.constant 0 : index
    %100 = vector.load %arg7[%c0_79, %c0_80] : memref<72x512xf32, #tpu.memory_space<vmem>>, vector<72x512xf32>
    %cst_81 = arith.constant dense<0.000000e+00> : vector<8x512xf32>
    %101 = tpu.matmul %99, %100, %cst_81 {dimension_numbers = #tpu.dot_dimension_numbers<[1], [0], [0], [1], [0, 0, 1, 1], [], []>} : vector<8x72xf32>, vector<72x512xf32>, vector<8x512xf32> -> vector<8x512xf32>
    %102 = vector.extract_strided_slice %101 {offsets = [0, 0], sizes = [8, 256], strides = [1, 1]} : vector<8x512xf32> to vector<8x256xf32>
    %cst_82 = arith.constant dense<0.000000e+00> : vector<8xf32>
    %103 = vector.multi_reduction <add>, %102, %cst_82 [1] : vector<8x256xf32> to vector<8xf32>
    %104 = vector.shape_cast %103 : vector<8xf32> to vector<8x1xf32>
    %cst_83 = arith.constant 3.906250e-03 : f32
    %105 = vector.broadcast %cst_83 : f32 to vector<8x1xf32>
    %106 = arith.mulf %104, %105 : vector<8x1xf32>
    %107 = arith.mulf %102, %102 : vector<8x256xf32>
    %cst_84 = arith.constant dense<0.000000e+00> : vector<8xf32>
    %108 = vector.multi_reduction <add>, %107, %cst_84 [1] : vector<8x256xf32> to vector<8xf32>
    %109 = vector.shape_cast %108 : vector<8xf32> to vector<8x1xf32>
    %cst_85 = arith.constant 3.906250e-03 : f32
    %110 = vector.broadcast %cst_85 : f32 to vector<8x1xf32>
    %111 = arith.mulf %109, %110 : vector<8x1xf32>
    %112 = arith.mulf %106, %106 : vector<8x1xf32>
    %113 = arith.subf %111, %112 : vector<8x1xf32>
    %cst_86 = arith.constant 0.000000e+00 : f32
    %114 = vector.broadcast %cst_86 : f32 to vector<8x1xf32>
    %115 = arith.maximumf %113, %114 : vector<8x1xf32>
    %116 = vector.broadcast %106 : vector<8x1xf32> to vector<8x256xf32>
    %117 = arith.subf %102, %116 : vector<8x256xf32>
    %cst_87 = arith.constant 9.99999974E-6 : f32
    %118 = vector.broadcast %cst_87 : f32 to vector<8x1xf32>
    %119 = arith.addf %115, %118 : vector<8x1xf32>
    %120 = math.rsqrt %119 : vector<8x1xf32>
    %121 = vector.broadcast %120 : vector<8x1xf32> to vector<8x256xf32>
    %122 = arith.mulf %117, %121 : vector<8x256xf32>
    %123 = vector.broadcast %0 : vector<8x1xf32> to vector<8x256xf32>
    %124 = arith.mulf %122, %123 : vector<8x256xf32>
    %125 = vector.broadcast %1 : vector<8x1xf32> to vector<8x256xf32>
    %126 = arith.addf %124, %125 : vector<8x256xf32>
    %cst_88 = arith.constant 0.000000e+00 : f32
    %127 = vector.broadcast %cst_88 : f32 to vector<8x256xf32>
    %128 = arith.cmpf oge, %126, %127 : vector<8x256xf32>
    %cst_89 = arith.constant 2.000000e-01 : f32
    %129 = vector.broadcast %cst_89 : f32 to vector<8x256xf32>
    %130 = arith.mulf %129, %126 : vector<8x256xf32>
    %131 = arith.select %128, %126, %130 : vector<8x256xi1>, vector<8x256xf32>
    %c0_90 = arith.constant 0 : index
    %c0_91 = arith.constant 0 : index
    %132 = vector.load %arg9[%c0_90, %c0_91] : memref<8x512xf32, #tpu.memory_space<vmem>>, vector<8x256xf32>
    tpu.vector_store %arg9[%c0_90, %c0_91], %131 {strides = array<i32>} : memref<8x512xf32, #tpu.memory_space<vmem>>, vector<8x256xf32>,
    %133 = vector.extract_strided_slice %101 {offsets = [0, 256], sizes = [8, 256], strides = [1, 1]} : vector<8x512xf32> to vector<8x256xf32>
    %cst_92 = arith.constant dense<0.000000e+00> : vector<8xf32>
    %134 = vector.multi_reduction <add>, %133, %cst_92 [1] : vector<8x256xf32> to vector<8xf32>
    %135 = vector.shape_cast %134 : vector<8xf32> to vector<8x1xf32>
    %cst_93 = arith.constant 3.906250e-03 : f32
    %136 = vector.broadcast %cst_93 : f32 to vector<8x1xf32>
    %137 = arith.mulf %135, %136 : vector<8x1xf32>
    %138 = arith.mulf %133, %133 : vector<8x256xf32>
    %cst_94 = arith.constant dense<0.000000e+00> : vector<8xf32>
    %139 = vector.multi_reduction <add>, %138, %cst_94 [1] : vector<8x256xf32> to vector<8xf32>
    %140 = vector.shape_cast %139 : vector<8xf32> to vector<8x1xf32>
    %cst_95 = arith.constant 3.906250e-03 : f32
    %141 = vector.broadcast %cst_95 : f32 to vector<8x1xf32>
    %142 = arith.mulf %140, %141 : vector<8x1xf32>
    %143 = arith.mulf %137, %137 : vector<8x1xf32>
    %144 = arith.subf %142, %143 : vector<8x1xf32>
    %cst_96 = arith.constant 0.000000e+00 : f32
    %145 = vector.broadcast %cst_96 : f32 to vector<8x1xf32>
    %146 = arith.maximumf %144, %145 : vector<8x1xf32>
    %147 = vector.broadcast %137 : vector<8x1xf32> to vector<8x256xf32>
    %148 = arith.subf %133, %147 : vector<8x256xf32>
    %cst_97 = arith.constant 9.99999974E-6 : f32
    %149 = vector.broadcast %cst_97 : f32 to vector<8x1xf32>
    %150 = arith.addf %146, %149 : vector<8x1xf32>
    %151 = math.rsqrt %150 : vector<8x1xf32>
    %152 = vector.broadcast %151 : vector<8x1xf32> to vector<8x256xf32>
    %153 = arith.mulf %148, %152 : vector<8x256xf32>
    %154 = vector.broadcast %0 : vector<8x1xf32> to vector<8x256xf32>
    %155 = arith.mulf %153, %154 : vector<8x256xf32>
    %156 = vector.broadcast %1 : vector<8x1xf32> to vector<8x256xf32>
    %157 = arith.addf %155, %156 : vector<8x256xf32>
    %cst_98 = arith.constant 0.000000e+00 : f32
    %158 = vector.broadcast %cst_98 : f32 to vector<8x256xf32>
    %159 = arith.cmpf oge, %157, %158 : vector<8x256xf32>
    %cst_99 = arith.constant 2.000000e-01 : f32
    %160 = vector.broadcast %cst_99 : f32 to vector<8x256xf32>
    %161 = arith.mulf %160, %157 : vector<8x256xf32>
    %162 = arith.select %159, %157, %161 : vector<8x256xi1>, vector<8x256xf32>
    %c0_100 = arith.constant 0 : index
    %c256_101 = arith.constant 256 : index
    %163 = vector.load %arg9[%c0_100, %c256_101] : memref<8x512xf32, #tpu.memory_space<vmem>>, vector<8x256xf32>
    tpu.vector_store %arg9[%c0_100, %c256_101], %162 {strides = array<i32>} : memref<8x512xf32, #tpu.memory_space<vmem>>, vector<8x256xf32>,
    %c0_102 = arith.constant 0 : index
    %c0_103 = arith.constant 0 : index
    %164 = vector.load %arg9[%c0_102, %c0_103] : memref<8x512xf32, #tpu.memory_space<vmem>>, vector<8x256xf32>
    %c17_i32_104 = arith.constant 17 : i32
    %165 = tpu.dynamic_rotate %164 by %c17_i32_104 dim 1 : vector<8x256xf32>, i32 -> vector<8x256xf32>
    %c0_105 = arith.constant 0 : index
    %c0_106 = arith.constant 0 : index
    %166 = vector.load %arg5[%c0_105, %c0_106] : memref<9x256xf32, #tpu.memory_space<vmem>>, vector<1x256xf32>
    %167 = vector.broadcast %166 : vector<1x256xf32> to vector<8x256xf32>
    %168 = arith.mulf %165, %167 : vector<8x256xf32>
    %c0_107 = arith.constant 0 : index
    %c0_108 = arith.constant 0 : index
    %169 = vector.load %arg8[%c0_107, %c0_108] : memref<72x512xf32, #tpu.memory_space<vmem>>, vector<8x256xf32>
    tpu.vector_store %arg8[%c0_107, %c0_108], %168 {strides = array<i32>} : memref<72x512xf32, #tpu.memory_space<vmem>>, vector<8x256xf32>,
    %c16_i32_109 = arith.constant 16 : i32
    %170 = tpu.dynamic_rotate %164 by %c16_i32_109 dim 1 : vector<8x256xf32>, i32 -> vector<8x256xf32>
    %c1_110 = arith.constant 1 : index
    %c0_111 = arith.constant 0 : index
    %171 = vector.load %arg5[%c1_110, %c0_111] : memref<9x256xf32, #tpu.memory_space<vmem>>, vector<1x256xf32>
    %172 = vector.broadcast %171 : vector<1x256xf32> to vector<8x256xf32>
    %173 = arith.mulf %170, %172 : vector<8x256xf32>
    %c8_112 = arith.constant 8 : index
    %c0_113 = arith.constant 0 : index
    %174 = vector.load %arg8[%c8_112, %c0_113] : memref<72x512xf32, #tpu.memory_space<vmem>>, vector<8x256xf32>
    tpu.vector_store %arg8[%c8_112, %c0_113], %173 {strides = array<i32>} : memref<72x512xf32, #tpu.memory_space<vmem>>, vector<8x256xf32>,
    %c15_i32_114 = arith.constant 15 : i32
    %175 = tpu.dynamic_rotate %164 by %c15_i32_114 dim 1 : vector<8x256xf32>, i32 -> vector<8x256xf32>
    %c2_115 = arith.constant 2 : index
    %c0_116 = arith.constant 0 : index
    %176 = vector.load %arg5[%c2_115, %c0_116] : memref<9x256xf32, #tpu.memory_space<vmem>>, vector<1x256xf32>
    %177 = vector.broadcast %176 : vector<1x256xf32> to vector<8x256xf32>
    %178 = arith.mulf %175, %177 : vector<8x256xf32>
    %c16_117 = arith.constant 16 : index
    %c0_118 = arith.constant 0 : index
    %179 = vector.load %arg8[%c16_117, %c0_118] : memref<72x512xf32, #tpu.memory_space<vmem>>, vector<8x256xf32>
    tpu.vector_store %arg8[%c16_117, %c0_118], %178 {strides = array<i32>} : memref<72x512xf32, #tpu.memory_space<vmem>>, vector<8x256xf32>,
    %c1_i32_119 = arith.constant 1 : i32
    %180 = tpu.dynamic_rotate %164 by %c1_i32_119 dim 1 : vector<8x256xf32>, i32 -> vector<8x256xf32>
    %c3_120 = arith.constant 3 : index
    %c0_121 = arith.constant 0 : index
    %181 = vector.load %arg5[%c3_120, %c0_121] : memref<9x256xf32, #tpu.memory_space<vmem>>, vector<1x256xf32>
    %182 = vector.broadcast %181 : vector<1x256xf32> to vector<8x256xf32>
    %183 = arith.mulf %180, %182 : vector<8x256xf32>
    %c24_122 = arith.constant 24 : index
    %c0_123 = arith.constant 0 : index
    %184 = vector.load %arg8[%c24_122, %c0_123] : memref<72x512xf32, #tpu.memory_space<vmem>>, vector<8x256xf32>
    tpu.vector_store %arg8[%c24_122, %c0_123], %183 {strides = array<i32>} : memref<72x512xf32, #tpu.memory_space<vmem>>, vector<8x256xf32>,
    %c4_124 = arith.constant 4 : index
    %c0_125 = arith.constant 0 : index
    %185 = vector.load %arg5[%c4_124, %c0_125] : memref<9x256xf32, #tpu.memory_space<vmem>>, vector<1x256xf32>
    %186 = vector.broadcast %185 : vector<1x256xf32> to vector<8x256xf32>
    %187 = arith.mulf %164, %186 : vector<8x256xf32>
    %c32_126 = arith.constant 32 : index
    %c0_127 = arith.constant 0 : index
    %188 = vector.load %arg8[%c32_126, %c0_127] : memref<72x512xf32, #tpu.memory_space<vmem>>, vector<8x256xf32>
    tpu.vector_store %arg8[%c32_126, %c0_127], %187 {strides = array<i32>} : memref<72x512xf32, #tpu.memory_space<vmem>>, vector<8x256xf32>,
    %c255_i32_128 = arith.constant 255 : i32
    %189 = tpu.dynamic_rotate %164 by %c255_i32_128 dim 1 : vector<8x256xf32>, i32 -> vector<8x256xf32>
    %c5_129 = arith.constant 5 : index
    %c0_130 = arith.constant 0 : index
    %190 = vector.load %arg5[%c5_129, %c0_130] : memref<9x256xf32, #tpu.memory_space<vmem>>, vector<1x256xf32>
    %191 = vector.broadcast %190 : vector<1x256xf32> to vector<8x256xf32>
    %192 = arith.mulf %189, %191 : vector<8x256xf32>
    %c40_131 = arith.constant 40 : index
    %c0_132 = arith.constant 0 : index
    %193 = vector.load %arg8[%c40_131, %c0_132] : memref<72x512xf32, #tpu.memory_space<vmem>>, vector<8x256xf32>
    tpu.vector_store %arg8[%c40_131, %c0_132], %192 {strides = array<i32>} : memref<72x512xf32, #tpu.memory_space<vmem>>, vector<8x256xf32>,
    %c241_i32_133 = arith.constant 241 : i32
    %194 = tpu.dynamic_rotate %164 by %c241_i32_133 dim 1 : vector<8x256xf32>, i32 -> vector<8x256xf32>
    %c6_134 = arith.constant 6 : index
    %c0_135 = arith.constant 0 : index
    %195 = vector.load %arg5[%c6_134, %c0_135] : memref<9x256xf32, #tpu.memory_space<vmem>>, vector<1x256xf32>
    %196 = vector.broadcast %195 : vector<1x256xf32> to vector<8x256xf32>
    %197 = arith.mulf %194, %196 : vector<8x256xf32>
    %c48_136 = arith.constant 48 : index
    %c0_137 = arith.constant 0 : index
    %198 = vector.load %arg8[%c48_136, %c0_137] : memref<72x512xf32, #tpu.memory_space<vmem>>, vector<8x256xf32>
    tpu.vector_store %arg8[%c48_136, %c0_137], %197 {strides = array<i32>} : memref<72x512xf32, #tpu.memory_space<vmem>>, vector<8x256xf32>,
    %c240_i32_138 = arith.constant 240 : i32
    %199 = tpu.dynamic_rotate %164 by %c240_i32_138 dim 1 : vector<8x256xf32>, i32 -> vector<8x256xf32>
    %c7_139 = arith.constant 7 : index
    %c0_140 = arith.constant 0 : index
    %200 = vector.load %arg5[%c7_139, %c0_140] : memref<9x256xf32, #tpu.memory_space<vmem>>, vector<1x256xf32>
    %201 = vector.broadcast %200 : vector<1x256xf32> to vector<8x256xf32>
    %202 = arith.mulf %199, %201 : vector<8x256xf32>
    %c56_141 = arith.constant 56 : index
    %c0_142 = arith.constant 0 : index
    %203 = vector.load %arg8[%c56_141, %c0_142] : memref<72x512xf32, #tpu.memory_space<vmem>>, vector<8x256xf32>
    tpu.vector_store %arg8[%c56_141, %c0_142], %202 {strides = array<i32>} : memref<72x512xf32, #tpu.memory_space<vmem>>, vector<8x256xf32>,
    %c239_i32_143 = arith.constant 239 : i32
    %204 = tpu.dynamic_rotate %164 by %c239_i32_143 dim 1 : vector<8x256xf32>, i32 -> vector<8x256xf32>
    %c8_144 = arith.constant 8 : index
    %c0_145 = arith.constant 0 : index
    %205 = vector.load %arg5[%c8_144, %c0_145] : memref<9x256xf32, #tpu.memory_space<vmem>>, vector<1x256xf32>
    %206 = vector.broadcast %205 : vector<1x256xf32> to vector<8x256xf32>
    %207 = arith.mulf %204, %206 : vector<8x256xf32>
    %c64_146 = arith.constant 64 : index
    %c0_147 = arith.constant 0 : index
    %208 = vector.load %arg8[%c64_146, %c0_147] : memref<72x512xf32, #tpu.memory_space<vmem>>, vector<8x256xf32>
    tpu.vector_store %arg8[%c64_146, %c0_147], %207 {strides = array<i32>} : memref<72x512xf32, #tpu.memory_space<vmem>>, vector<8x256xf32>,
    %c0_148 = arith.constant 0 : index
    %c256_149 = arith.constant 256 : index
    %209 = vector.load %arg9[%c0_148, %c256_149] : memref<8x512xf32, #tpu.memory_space<vmem>>, vector<8x256xf32>
    %c17_i32_150 = arith.constant 17 : i32
    %210 = tpu.dynamic_rotate %209 by %c17_i32_150 dim 1 : vector<8x256xf32>, i32 -> vector<8x256xf32>
    %c0_151 = arith.constant 0 : index
    %c0_152 = arith.constant 0 : index
    %211 = vector.load %arg5[%c0_151, %c0_152] : memref<9x256xf32, #tpu.memory_space<vmem>>, vector<1x256xf32>
    %212 = vector.broadcast %211 : vector<1x256xf32> to vector<8x256xf32>
    %213 = arith.mulf %210, %212 : vector<8x256xf32>
    %c0_153 = arith.constant 0 : index
    %c256_154 = arith.constant 256 : index
    %214 = vector.load %arg8[%c0_153, %c256_154] : memref<72x512xf32, #tpu.memory_space<vmem>>, vector<8x256xf32>
    tpu.vector_store %arg8[%c0_153, %c256_154], %213 {strides = array<i32>} : memref<72x512xf32, #tpu.memory_space<vmem>>, vector<8x256xf32>,
    %c16_i32_155 = arith.constant 16 : i32
    %215 = tpu.dynamic_rotate %209 by %c16_i32_155 dim 1 : vector<8x256xf32>, i32 -> vector<8x256xf32>
    %c1_156 = arith.constant 1 : index
    %c0_157 = arith.constant 0 : index
    %216 = vector.load %arg5[%c1_156, %c0_157] : memref<9x256xf32, #tpu.memory_space<vmem>>, vector<1x256xf32>
    %217 = vector.broadcast %216 : vector<1x256xf32> to vector<8x256xf32>
    %218 = arith.mulf %215, %217 : vector<8x256xf32>
    %c8_158 = arith.constant 8 : index
    %c256_159 = arith.constant 256 : index
    %219 = vector.load %arg8[%c8_158, %c256_159] : memref<72x512xf32, #tpu.memory_space<vmem>>, vector<8x256xf32>
    tpu.vector_store %arg8[%c8_158, %c256_159], %218 {strides = array<i32>} : memref<72x512xf32, #tpu.memory_space<vmem>>, vector<8x256xf32>,
    %c15_i32_160 = arith.constant 15 : i32
    %220 = tpu.dynamic_rotate %209 by %c15_i32_160 dim 1 : vector<8x256xf32>, i32 -> vector<8x256xf32>
    %c2_161 = arith.constant 2 : index
    %c0_162 = arith.constant 0 : index
    %221 = vector.load %arg5[%c2_161, %c0_162] : memref<9x256xf32, #tpu.memory_space<vmem>>, vector<1x256xf32>
    %222 = vector.broadcast %221 : vector<1x256xf32> to vector<8x256xf32>
    %223 = arith.mulf %220, %222 : vector<8x256xf32>
    %c16_163 = arith.constant 16 : index
    %c256_164 = arith.constant 256 : index
    %224 = vector.load %arg8[%c16_163, %c256_164] : memref<72x512xf32, #tpu.memory_space<vmem>>, vector<8x256xf32>
    tpu.vector_store %arg8[%c16_163, %c256_164], %223 {strides = array<i32>} : memref<72x512xf32, #tpu.memory_space<vmem>>, vector<8x256xf32>,
    %c1_i32_165 = arith.constant 1 : i32
    %225 = tpu.dynamic_rotate %209 by %c1_i32_165 dim 1 : vector<8x256xf32>, i32 -> vector<8x256xf32>
    %c3_166 = arith.constant 3 : index
    %c0_167 = arith.constant 0 : index
    %226 = vector.load %arg5[%c3_166, %c0_167] : memref<9x256xf32, #tpu.memory_space<vmem>>, vector<1x256xf32>
    %227 = vector.broadcast %226 : vector<1x256xf32> to vector<8x256xf32>
    %228 = arith.mulf %225, %227 : vector<8x256xf32>
    %c24_168 = arith.constant 24 : index
    %c256_169 = arith.constant 256 : index
    %229 = vector.load %arg8[%c24_168, %c256_169] : memref<72x512xf32, #tpu.memory_space<vmem>>, vector<8x256xf32>
    tpu.vector_store %arg8[%c24_168, %c256_169], %228 {strides = array<i32>} : memref<72x512xf32, #tpu.memory_space<vmem>>, vector<8x256xf32>,
    %c4_170 = arith.constant 4 : index
    %c0_171 = arith.constant 0 : index
    %230 = vector.load %arg5[%c4_170, %c0_171] : memref<9x256xf32, #tpu.memory_space<vmem>>, vector<1x256xf32>
    %231 = vector.broadcast %230 : vector<1x256xf32> to vector<8x256xf32>
    %232 = arith.mulf %209, %231 : vector<8x256xf32>
    %c32_172 = arith.constant 32 : index
    %c256_173 = arith.constant 256 : index
    %233 = vector.load %arg8[%c32_172, %c256_173] : memref<72x512xf32, #tpu.memory_space<vmem>>, vector<8x256xf32>
    tpu.vector_store %arg8[%c32_172, %c256_173], %232 {strides = array<i32>} : memref<72x512xf32, #tpu.memory_space<vmem>>, vector<8x256xf32>,
    %c255_i32_174 = arith.constant 255 : i32
    %234 = tpu.dynamic_rotate %209 by %c255_i32_174 dim 1 : vector<8x256xf32>, i32 -> vector<8x256xf32>
    %c5_175 = arith.constant 5 : index
    %c0_176 = arith.constant 0 : index
    %235 = vector.load %arg5[%c5_175, %c0_176] : memref<9x256xf32, #tpu.memory_space<vmem>>, vector<1x256xf32>
    %236 = vector.broadcast %235 : vector<1x256xf32> to vector<8x256xf32>
    %237 = arith.mulf %234, %236 : vector<8x256xf32>
    %c40_177 = arith.constant 40 : index
    %c256_178 = arith.constant 256 : index
    %238 = vector.load %arg8[%c40_177, %c256_178] : memref<72x512xf32, #tpu.memory_space<vmem>>, vector<8x256xf32>
    tpu.vector_store %arg8[%c40_177, %c256_178], %237 {strides = array<i32>} : memref<72x512xf32, #tpu.memory_space<vmem>>, vector<8x256xf32>,
    %c241_i32_179 = arith.constant 241 : i32
    %239 = tpu.dynamic_rotate %209 by %c241_i32_179 dim 1 : vector<8x256xf32>, i32 -> vector<8x256xf32>
    %c6_180 = arith.constant 6 : index
    %c0_181 = arith.constant 0 : index
    %240 = vector.load %arg5[%c6_180, %c0_181] : memref<9x256xf32, #tpu.memory_space<vmem>>, vector<1x256xf32>
    %241 = vector.broadcast %240 : vector<1x256xf32> to vector<8x256xf32>
    %242 = arith.mulf %239, %241 : vector<8x256xf32>
    %c48_182 = arith.constant 48 : index
    %c256_183 = arith.constant 256 : index
    %243 = vector.load %arg8[%c48_182, %c256_183] : memref<72x512xf32, #tpu.memory_space<vmem>>, vector<8x256xf32>
    tpu.vector_store %arg8[%c48_182, %c256_183], %242 {strides = array<i32>} : memref<72x512xf32, #tpu.memory_space<vmem>>, vector<8x256xf32>,
    %c240_i32_184 = arith.constant 240 : i32
    %244 = tpu.dynamic_rotate %209 by %c240_i32_184 dim 1 : vector<8x256xf32>, i32 -> vector<8x256xf32>
    %c7_185 = arith.constant 7 : index
    %c0_186 = arith.constant 0 : index
    %245 = vector.load %arg5[%c7_185, %c0_186] : memref<9x256xf32, #tpu.memory_space<vmem>>, vector<1x256xf32>
    %246 = vector.broadcast %245 : vector<1x256xf32> to vector<8x256xf32>
    %247 = arith.mulf %244, %246 : vector<8x256xf32>
    %c56_187 = arith.constant 56 : index
    %c256_188 = arith.constant 256 : index
    %248 = vector.load %arg8[%c56_187, %c256_188] : memref<72x512xf32, #tpu.memory_space<vmem>>, vector<8x256xf32>
    tpu.vector_store %arg8[%c56_187, %c256_188], %247 {strides = array<i32>} : memref<72x512xf32, #tpu.memory_space<vmem>>, vector<8x256xf32>,
    %c239_i32_189 = arith.constant 239 : i32
    %249 = tpu.dynamic_rotate %209 by %c239_i32_189 dim 1 : vector<8x256xf32>, i32 -> vector<8x256xf32>
    %c8_190 = arith.constant 8 : index
    %c0_191 = arith.constant 0 : index
    %250 = vector.load %arg5[%c8_190, %c0_191] : memref<9x256xf32, #tpu.memory_space<vmem>>, vector<1x256xf32>
    %251 = vector.broadcast %250 : vector<1x256xf32> to vector<8x256xf32>
    %252 = arith.mulf %249, %251 : vector<8x256xf32>
    %c64_192 = arith.constant 64 : index
    %c256_193 = arith.constant 256 : index
    %253 = vector.load %arg8[%c64_192, %c256_193] : memref<72x512xf32, #tpu.memory_space<vmem>>, vector<8x256xf32>
    tpu.vector_store %arg8[%c64_192, %c256_193], %252 {strides = array<i32>} : memref<72x512xf32, #tpu.memory_space<vmem>>, vector<8x256xf32>,
    %c0_194 = arith.constant 0 : index
    %c0_195 = arith.constant 0 : index
    %254 = vector.load %arg3[%c0_194, %c0_195] : memref<8x72xf32, #tpu.memory_space<vmem>>, vector<8x72xf32>
    %c0_196 = arith.constant 0 : index
    %c0_197 = arith.constant 0 : index
    %255 = vector.load %arg8[%c0_196, %c0_197] : memref<72x512xf32, #tpu.memory_space<vmem>>, vector<72x512xf32>
    %cst_198 = arith.constant dense<0.000000e+00> : vector<8x512xf32>
    %256 = tpu.matmul %254, %255, %cst_198 {dimension_numbers = #tpu.dot_dimension_numbers<[1], [0], [0], [1], [0, 0, 1, 1], [], []>} : vector<8x72xf32>, vector<72x512xf32>, vector<8x512xf32> -> vector<8x512xf32>
    %257 = vector.extract_strided_slice %256 {offsets = [0, 0], sizes = [8, 256], strides = [1, 1]} : vector<8x512xf32> to vector<8x256xf32>
    %cst_199 = arith.constant dense<0.000000e+00> : vector<8xf32>
    %258 = vector.multi_reduction <add>, %257, %cst_199 [1] : vector<8x256xf32> to vector<8xf32>
    %259 = vector.shape_cast %258 : vector<8xf32> to vector<8x1xf32>
    %cst_200 = arith.constant 3.906250e-03 : f32
    %260 = vector.broadcast %cst_200 : f32 to vector<8x1xf32>
    %261 = arith.mulf %259, %260 : vector<8x1xf32>
    %262 = arith.mulf %257, %257 : vector<8x256xf32>
    %cst_201 = arith.constant dense<0.000000e+00> : vector<8xf32>
    %263 = vector.multi_reduction <add>, %262, %cst_201 [1] : vector<8x256xf32> to vector<8xf32>
    %264 = vector.shape_cast %263 : vector<8xf32> to vector<8x1xf32>
    %cst_202 = arith.constant 3.906250e-03 : f32
    %265 = vector.broadcast %cst_202 : f32 to vector<8x1xf32>
    %266 = arith.mulf %264, %265 : vector<8x1xf32>
    %267 = arith.mulf %261, %261 : vector<8x1xf32>
    %268 = arith.subf %266, %267 : vector<8x1xf32>
    %cst_203 = arith.constant 0.000000e+00 : f32
    %269 = vector.broadcast %cst_203 : f32 to vector<8x1xf32>
    %270 = arith.maximumf %268, %269 : vector<8x1xf32>
    %271 = vector.broadcast %261 : vector<8x1xf32> to vector<8x256xf32>
    %272 = arith.subf %257, %271 : vector<8x256xf32>
    %cst_204 = arith.constant 9.99999974E-6 : f32
    %273 = vector.broadcast %cst_204 : f32 to vector<8x1xf32>
    %274 = arith.addf %270, %273 : vector<8x1xf32>
    %275 = math.rsqrt %274 : vector<8x1xf32>
    %276 = vector.broadcast %275 : vector<8x1xf32> to vector<8x256xf32>
    %277 = arith.mulf %272, %276 : vector<8x256xf32>
    %278 = vector.broadcast %2 : vector<8x1xf32> to vector<8x256xf32>
    %279 = arith.mulf %277, %278 : vector<8x256xf32>
    %280 = vector.broadcast %3 : vector<8x1xf32> to vector<8x256xf32>
    %281 = arith.addf %279, %280 : vector<8x256xf32>
    %cst_205 = arith.constant 0.000000e+00 : f32
    %282 = vector.broadcast %cst_205 : f32 to vector<8x256xf32>
    %283 = arith.cmpf oge, %281, %282 : vector<8x256xf32>
    %cst_206 = arith.constant 2.000000e-01 : f32
    %284 = vector.broadcast %cst_206 : f32 to vector<8x256xf32>
    %285 = arith.mulf %284, %281 : vector<8x256xf32>
    %286 = arith.select %283, %281, %285 : vector<8x256xi1>, vector<8x256xf32>
    %c0_207 = arith.constant 0 : index
    %c0_208 = arith.constant 0 : index
    %c0_209 = arith.constant 0 : index
    %287 = vector.load %arg6[%c0_207, %c0_208, %c0_209] : memref<2x8x256xf32, #tpu.memory_space<vmem>>, vector<1x8x256xf32>
    %288 = vector.shape_cast %287 : vector<1x8x256xf32> to vector<8x256xf32>
    %289 = vector.shape_cast %286 : vector<8x256xf32> to vector<1x8x256xf32>
    tpu.vector_store %arg6[%c0_207, %c0_208, %c0_209], %289 {strides = array<i32>} : memref<2x8x256xf32, #tpu.memory_space<vmem>>, vector<1x8x256xf32>,
    %290 = vector.extract_strided_slice %256 {offsets = [0, 256], sizes = [8, 256], strides = [1, 1]} : vector<8x512xf32> to vector<8x256xf32>
    %cst_210 = arith.constant dense<0.000000e+00> : vector<8xf32>
    %291 = vector.multi_reduction <add>, %290, %cst_210 [1] : vector<8x256xf32> to vector<8xf32>
    %292 = vector.shape_cast %291 : vector<8xf32> to vector<8x1xf32>
    %cst_211 = arith.constant 3.906250e-03 : f32
    %293 = vector.broadcast %cst_211 : f32 to vector<8x1xf32>
    %294 = arith.mulf %292, %293 : vector<8x1xf32>
    %295 = arith.mulf %290, %290 : vector<8x256xf32>
    %cst_212 = arith.constant dense<0.000000e+00> : vector<8xf32>
    %296 = vector.multi_reduction <add>, %295, %cst_212 [1] : vector<8x256xf32> to vector<8xf32>
    %297 = vector.shape_cast %296 : vector<8xf32> to vector<8x1xf32>
    %cst_213 = arith.constant 3.906250e-03 : f32
    %298 = vector.broadcast %cst_213 : f32 to vector<8x1xf32>
    %299 = arith.mulf %297, %298 : vector<8x1xf32>
    %300 = arith.mulf %294, %294 : vector<8x1xf32>
    %301 = arith.subf %299, %300 : vector<8x1xf32>
    %cst_214 = arith.constant 0.000000e+00 : f32
    %302 = vector.broadcast %cst_214 : f32 to vector<8x1xf32>
    %303 = arith.maximumf %301, %302 : vector<8x1xf32>
    %304 = vector.broadcast %294 : vector<8x1xf32> to vector<8x256xf32>
    %305 = arith.subf %290, %304 : vector<8x256xf32>
    %cst_215 = arith.constant 9.99999974E-6 : f32
    %306 = vector.broadcast %cst_215 : f32 to vector<8x1xf32>
    %307 = arith.addf %303, %306 : vector<8x1xf32>
    %308 = math.rsqrt %307 : vector<8x1xf32>
    %309 = vector.broadcast %308 : vector<8x1xf32> to vector<8x256xf32>
    %310 = arith.mulf %305, %309 : vector<8x256xf32>
    %311 = vector.broadcast %2 : vector<8x1xf32> to vector<8x256xf32>
    %312 = arith.mulf %310, %311 : vector<8x256xf32>
    %313 = vector.broadcast %3 : vector<8x1xf32> to vector<8x256xf32>
    %314 = arith.addf %312, %313 : vector<8x256xf32>
    %cst_216 = arith.constant 0.000000e+00 : f32
    %315 = vector.broadcast %cst_216 : f32 to vector<8x256xf32>
    %316 = arith.cmpf oge, %314, %315 : vector<8x256xf32>
    %cst_217 = arith.constant 2.000000e-01 : f32
    %317 = vector.broadcast %cst_217 : f32 to vector<8x256xf32>
    %318 = arith.mulf %317, %314 : vector<8x256xf32>
    %319 = arith.select %316, %314, %318 : vector<8x256xi1>, vector<8x256xf32>
    %c1_218 = arith.constant 1 : index
    %c0_219 = arith.constant 0 : index
    %c0_220 = arith.constant 0 : index
    %320 = vector.load %arg6[%c1_218, %c0_219, %c0_220] : memref<2x8x256xf32, #tpu.memory_space<vmem>>, vector<1x8x256xf32>
    %321 = vector.shape_cast %320 : vector<1x8x256xf32> to vector<8x256xf32>
    %322 = vector.shape_cast %319 : vector<8x256xf32> to vector<1x8x256xf32>
    tpu.vector_store %arg6[%c1_218, %c0_219, %c0_220], %322 {strides = array<i32>} : memref<2x8x256xf32, #tpu.memory_space<vmem>>, vector<1x8x256xf32>,
    return
  }
  func.func @transform_0(%arg0: i32) -> (i32, i32, i32) {
    %c0_i32 = arith.constant 0 : i32
    %c0_i32_0 = arith.constant 0 : i32
    %c0_i32_1 = arith.constant 0 : i32
    return %arg0, %c0_i32, %c0_i32_0 : i32, i32, i32
  }
  func.func @transform_1(%arg0: i32) -> (i32, i32) {
    %c0_i32 = arith.constant 0 : i32
    %c0_i32_0 = arith.constant 0 : i32
    %c0_i32_1 = arith.constant 0 : i32
    return %c0_i32, %c0_i32_0 : i32, i32
  }
  func.func @transform_2(%arg0: i32) -> (i32, i32) {
    %c0_i32 = arith.constant 0 : i32
    %c0_i32_0 = arith.constant 0 : i32
    %c0_i32_1 = arith.constant 0 : i32
    return %c0_i32, %c0_i32_0 : i32, i32
  }
  func.func @transform_3(%arg0: i32) -> (i32, i32) {
    %c0_i32 = arith.constant 0 : i32
    %c0_i32_0 = arith.constant 0 : i32
    %c0_i32_1 = arith.constant 0 : i32
    return %c0_i32, %c0_i32_0 : i32, i32
  }
  func.func @transform_4(%arg0: i32) -> (i32, i32) {
    %c0_i32 = arith.constant 0 : i32
    %c0_i32_0 = arith.constant 0 : i32
    %c0_i32_1 = arith.constant 0 : i32
    return %c0_i32, %c0_i32_0 : i32, i32
  }
  func.func @transform_5(%arg0: i32) -> (i32, i32, i32) {
    %c0_i32 = arith.constant 0 : i32
    %c0_i32_0 = arith.constant 0 : i32
    %c0_i32_1 = arith.constant 0 : i32
    return %arg0, %c0_i32, %c0_i32_0 : i32, i32, i32
  }
}

</mosaic_0001>

<llo_original>
// kernel: tpu_custom_call.1
$region0: #{tpu_custom_call.1}
  #allocation0 [shape = 'u32[]', space=smem, size = 0x4, offset = 0x4, fixed_abs, tag = 'smem constant byte address 0x4 - core index']
  #allocation1 [shape = 'u32[144,128]{1,0:T(1,128)}', space=vmem, size = 0x12000, scoped, tag = 'internal scratch']
  #allocation2 [shape = 'f32[72,512]{1,0:T(8,128)}', space=vmem, size = 0x24000, scoped, tag = 'scratch operand']
  #allocation3 [shape = 'f32[72,512]{1,0:T(8,128)}', space=vmem, size = 0x24000, scoped, tag = 'scratch operand']
  #allocation4 [shape = 'f32[8,512]{1,0:T(8,128)}', space=vmem, size = 0x4000, scoped, tag = 'scratch operand']
  %s0 = inlined_call_operand.hbm [shape: f32[2,4,256], index: 0, kind: input, shape index: {}]
  %s1 = inlined_call_operand.vmem [shape: f32[8,72], index: 1, kind: input, shape index: {}]
  %s2 = inlined_call_operand.hbm [shape: f32[8,72], index: 2, kind: input, shape index: {}]
  %s3 = inlined_call_operand.vmem [shape: f32[8,4], index: 3, kind: input, shape index: {}]
  %s4 = inlined_call_operand.hbm [shape: f32[9,256], index: 4, kind: input, shape index: {}]
  %s5 = inlined_call_operand.hbm [shape: f32[2,8,256], index: 5, kind: output, shape index: {}]
  %s6 = sld [smem:[#allocation0]]
  $region42: #{tpu_custom_call.1} parent=0
    _
  %s8 = ssub.s32 1, %s6
  %s9 = scalar_select 0, %s8, %s6
  $region1: #{tpu_custom_call.1} parent=0
    #allocation5 [shape = 'u8[8192]{0}', space=vmem, size = 0x2000, scoped, tag = 'input window, operand 0, single buffered']
    #allocation6 [shape = 's32[1]{0}', space=sflag, size = 0x4, scoped, tag = 'scoped memory for tpu_custom_call.1']
    #allocation7 [shape = 's32[1]{0}', space=sflag, size = 0x4, scoped, tag = 'scoped memory for tpu_custom_call.1']
    #allocation8 [shape = 'u8[4096]{0}', space=vmem, size = 0x1000, scoped, tag = 'input window, operand 2, single buffered']
    #allocation9 [shape = 's32[1]{0}', space=sflag, size = 0x4, scoped, tag = 'scoped memory for tpu_custom_call.1']
    #allocation10 [shape = 'u8[16384]{0}', space=vmem, size = 0x4000, scoped, tag = 'input window, operand 4, single buffered']
    #allocation11 [shape = 'u8[16384]{0}', space=vmem, size = 0x4000, scoped, tag = 'output window, operand 0, single buffered']
    %10 = vsyncpa [#allocation6], 0
    %11 = vsyncpa [#allocation9], 0
    %12 = vsyncpa [#allocation7], 0
    // Predicated region
    $region2: #{tpu_custom_call.1} parent=1 // pred_check
      _
    $region3: #{tpu_custom_call.1} parent=1 // pred_check_branch
      %14 = sbr.rel (0) target = $region5
    $region4: #{tpu_custom_call.1} parent=1 // pred_region
      %s16 = ssub.s32 256, 256
      %17 = vsyncadd [#allocation6], %s16
      %s18 = sshll.u32 [#allocation5], 4
      %s19 = int_to_ptr.vmem [resolvable:$true] %s18
      %24 = dma.hbm_to_vmem [thread:$0]  %s0, 256, %s19, [#allocation6], 128, 128, 8
    $region5: #{tpu_custom_call.1} parent=1 // pred_fallthru
      _
    // Predicated region
    $region6: #{tpu_custom_call.1} parent=1 // pred_check
      _
    $region7: #{tpu_custom_call.1} parent=1 // pred_check_branch
      %26 = sbr.rel (0) target = $region9
    $region8: #{tpu_custom_call.1} parent=1 // pred_region
      _
    $region9: #{tpu_custom_call.1} parent=1 // pred_fallthru
      _
    // Predicated region
    $region10: #{tpu_custom_call.1} parent=1 // pred_check
      _
    $region11: #{tpu_custom_call.1} parent=1 // pred_check_branch
      %28 = sbr.rel (0) target = $region13
    $region12: #{tpu_custom_call.1} parent=1 // pred_region
      %s30 = ssub.s32 128, 128
      %31 = vsyncadd [#allocation9], %s30
      %s33 = sshll.u32 [#allocation8], 4
      %s34 = int_to_ptr.vmem [resolvable:$true] %s33
      %36 = dma.hbm_to_vmem [thread:$0]  %s2, 128, %s34, [#allocation9]
    $region13: #{tpu_custom_call.1} parent=1 // pred_fallthru
      _
    // Predicated region
    $region14: #{tpu_custom_call.1} parent=1 // pred_check
      _
    $region15: #{tpu_custom_call.1} parent=1 // pred_check_branch
      %38 = sbr.rel (0) target = $region17
    $region16: #{tpu_custom_call.1} parent=1 // pred_region
      _
    $region17: #{tpu_custom_call.1} parent=1 // pred_fallthru
      _
    // Predicated region
    $region18: #{tpu_custom_call.1} parent=1 // pred_check
      _
    $region19: #{tpu_custom_call.1} parent=1 // pred_check_branch
      %40 = sbr.rel (0) target = $region21
    $region20: #{tpu_custom_call.1} parent=1 // pred_region
      %s42 = ssub.s32 512, 512
      %43 = vsyncadd [#allocation9], %s42
      %s44 = sshll.u32 [#allocation10], 4
      %s45 = int_to_ptr.vmem [resolvable:$true] %s44
      %50 = dma.hbm_to_vmem [thread:$0]  %s4, 512, %s45, [#allocation9], 256, 256, 16
    $region21: #{tpu_custom_call.1} parent=1 // pred_fallthru
      _
    // Predicated region
    $region22: #{tpu_custom_call.1} parent=1 // pred_check
      _
    $region23: #{tpu_custom_call.1} parent=1 // pred_check_branch
      %52 = sbr.rel (0) target = $region25
    $region24: #{tpu_custom_call.1} parent=1 // pred_region
      %53 = dma.done [#allocation6], 256
    $region25: #{tpu_custom_call.1} parent=1 // pred_fallthru
      _
    // Predicated region
    $region26: #{tpu_custom_call.1} parent=1 // pred_check
      _
    $region27: #{tpu_custom_call.1} parent=1 // pred_check_branch
      %55 = sbr.rel (0) target = $region29
    $region28: #{tpu_custom_call.1} parent=1 // pred_region
      %56 = dma.done [#allocation9], 128
    $region29: #{tpu_custom_call.1} parent=1 // pred_fallthru
      _
    // Predicated region
    $region30: #{tpu_custom_call.1} parent=1 // pred_check
      _
    $region31: #{tpu_custom_call.1} parent=1 // pred_check_branch
      %58 = sbr.rel (0) target = $region33
    $region32: #{tpu_custom_call.1} parent=1 // pred_region
      %59 = dma.done [#allocation9], 512
    $region33: #{tpu_custom_call.1} parent=1 // pred_fallthru
      _
    %v60 = vld [vmem:[%s3] sm:$0xff]
    %v61 = vld [vmem:[#allocation5] sm:$0xff]
    %v63 = vcombine.high %v61, %v61
    %vm65 = vcmask 1043456
    %v66 = vsel %vm65, %v61, 0.0
    %v67 = vsel %vm65, %v63, 0.0
    %68 = vrot.lane.b32.xlu0 %v66, 17
    %v69 = vpop.permute.xlu0 %68
    %70 = vrot.lane.b32.xlu0 %v67, 17
    %v71 = vpop.permute.xlu0 %70
    %v72 = vlaneseq
    %v73 = vand.u32 %v72, 127
    %vm74 = vcmp.lt.s32.totalorder %v73, 17
    %v75 = vsel %vm74, %v69, %v71
    %v76 = vsel %vm74, %v71, %v69
    %v77 = vld [vmem:[#allocation10] ss:$8 sm:$0x3]
    %v79 = vlaneseq
    %v80 = vshrl.u32 %v79, 7
    %v81 = vsub.s32 0, %v80
    %v82 = vrot.slane %v77, %v81
    %v83 = vlaneseq
    %v84 = vshrl.u32 %v83, 7
    %v85 = vsub.s32 1, %v84
    %v86 = vrot.slane %v77, %v85
    %v89 = vmul.f32 %v76, %v82
    %v90 = vmul.f32 %v75, %v86
    %91 = vst [vmem:[#allocation2] sm:$0xff] %v89
    %92 = vst [vmem:[#allocation2 + $0x8] sm:$0xff] %v90
    %93 = vrot.lane.b32.xlu0 %v66, 16
    %v94 = vpop.permute.xlu0 %93
    %95 = vrot.lane.b32.xlu0 %v67, 16
    %v96 = vpop.permute.xlu0 %95
    %vm97 = vcmp.lt.s32.totalorder %v73, 16
    %v98 = vsel %vm97, %v94, %v96
    %v99 = vsel %vm97, %v96, %v94
    %s100 = scalar_lea.vmem [#allocation10], 1
    %v101 = vld [vmem:[%s100] ss:$8 sm:$0x3]
    %v103 = vlaneseq
    %v104 = vshrl.u32 %v103, 7
    %v105 = vsub.s32 0, %v104
    %v106 = vrot.slane %v101, %v105
    %v107 = vlaneseq
    %v108 = vshrl.u32 %v107, 7
    %v109 = vsub.s32 1, %v108
    %v110 = vrot.slane %v101, %v109
    %v113 = vmul.f32 %v99, %v106
    %v114 = vmul.f32 %v98, %v110
    %115 = vst [vmem:[#allocation2 + $0x20] sm:$0xff] %v113
    %116 = vst [vmem:[#allocation2 + $0x28] sm:$0xff] %v114
    %117 = vrot.lane.b32.xlu0 %v66, 15
    %v118 = vpop.permute.xlu0 %117
    %119 = vrot.lane.b32.xlu0 %v67, 15
    %v120 = vpop.permute.xlu0 %119
    %vm121 = vcmp.lt.s32.totalorder %v73, 15
    %v122 = vsel %vm121, %v118, %v120
    %v123 = vsel %vm121, %v120, %v118
    %s124 = scalar_lea.vmem [#allocation10], 2
    %v125 = vld [vmem:[%s124] ss:$8 sm:$0x3]
    %v127 = vlaneseq
    %v128 = vshrl.u32 %v127, 7
    %v129 = vsub.s32 0, %v128
    %v130 = vrot.slane %v125, %v129
    %v131 = vlaneseq
    %v132 = vshrl.u32 %v131, 7
    %v133 = vsub.s32 1, %v132
    %v134 = vrot.slane %v125, %v133
    %v137 = vmul.f32 %v123, %v130
    %v138 = vmul.f32 %v122, %v134
    %139 = vst [vmem:[#allocation2 + $0x40] sm:$0xff] %v137
    %140 = vst [vmem:[#allocation2 + $0x48] sm:$0xff] %v138
    %141 = vrot.lane.b32.xlu0 %v66, 1
    %v142 = vpop.permute.xlu0 %141
    %143 = vrot.lane.b32.xlu0 %v67, 1
    %v144 = vpop.permute.xlu0 %143
    %vm145 = vcmp.lt.s32.totalorder %v73, 1
    %v146 = vsel %vm145, %v142, %v144
    %v147 = vsel %vm145, %v144, %v142
    %s148 = scalar_lea.vmem [#allocation10], 3
    %v149 = vld [vmem:[%s148] ss:$8 sm:$0x3]
    %v151 = vlaneseq
    %v152 = vshrl.u32 %v151, 7
    %v153 = vsub.s32 0, %v152
    %v154 = vrot.slane %v149, %v153
    %v155 = vlaneseq
    %v156 = vshrl.u32 %v155, 7
    %v157 = vsub.s32 1, %v156
    %v158 = vrot.slane %v149, %v157
    %v161 = vmul.f32 %v147, %v154
    %v162 = vmul.f32 %v146, %v158
    %163 = vst [vmem:[#allocation2 + $0x60] sm:$0xff] %v161
    %164 = vst [vmem:[#allocation2 + $0x68] sm:$0xff] %v162
    %s165 = scalar_lea.vmem [#allocation10], 4
    %v166 = vld [vmem:[%s165] ss:$8 sm:$0x3]
    %v168 = vlaneseq
    %v169 = vshrl.u32 %v168, 7
    %v170 = vsub.s32 0, %v169
    %v171 = vrot.slane %v166, %v170
    %v172 = vlaneseq
    %v173 = vshrl.u32 %v172, 7
    %v174 = vsub.s32 1, %v173
    %v175 = vrot.slane %v166, %v174
    %v178 = vmul.f32 %v66, %v171
    %v179 = vmul.f32 %v67, %v175
    %180 = vst [vmem:[#allocation2 + $0x80] sm:$0xff] %v178
    %181 = vst [vmem:[#allocation2 + $0x88] sm:$0xff] %v179
    %182 = vrot.lane.b32.xlu0 %v66, 127
    %v183 = vpop.permute.xlu0 %182
    %184 = vrot.lane.b32.xlu0 %v67, 127
    %v185 = vpop.permute.xlu0 %184
    %vm186 = vcmp.lt.s32.totalorder %v73, 127
    %v187 = vsel %vm186, %v183, %v185
    %v188 = vsel %vm186, %v185, %v183
    %s189 = scalar_lea.vmem [#allocation10], 5
    %v190 = vld [vmem:[%s189] ss:$8 sm:$0x3]
    %v192 = vlaneseq
    %v193 = vshrl.u32 %v192, 7
    %v194 = vsub.s32 0, %v193
    %v195 = vrot.slane %v190, %v194
    %v196 = vlaneseq
    %v197 = vshrl.u32 %v196, 7
    %v198 = vsub.s32 1, %v197
    %v199 = vrot.slane %v190, %v198
    %v202 = vmul.f32 %v187, %v195
    %v203 = vmul.f32 %v188, %v199
    %204 = vst [vmem:[#allocation2 + $0xa0] sm:$0xff] %v202
    %205 = vst [vmem:[#allocation2 + $0xa8] sm:$0xff] %v203
    %206 = vrot.lane.b32.xlu0 %v66, 113
    %v207 = vpop.permute.xlu0 %206
    %208 = vrot.lane.b32.xlu0 %v67, 113
    %v209 = vpop.permute.xlu0 %208
    %vm210 = vcmp.lt.s32.totalorder %v73, 113
    %v211 = vsel %vm210, %v207, %v209
    %v212 = vsel %vm210, %v209, %v207
    %s213 = scalar_lea.vmem [#allocation10], 6
    %v214 = vld [vmem:[%s213] ss:$8 sm:$0x3]
    %v216 = vlaneseq
    %v217 = vshrl.u32 %v216, 7
    %v218 = vsub.s32 0, %v217
    %v219 = vrot.slane %v214, %v218
    %v220 = vlaneseq
    %v221 = vshrl.u32 %v220, 7
    %v222 = vsub.s32 1, %v221
    %v223 = vrot.slane %v214, %v222
    %v226 = vmul.f32 %v211, %v219
    %v227 = vmul.f32 %v212, %v223
    %228 = vst [vmem:[#allocation2 + $0xc0] sm:$0xff] %v226
    %229 = vst [vmem:[#allocation2 + $0xc8] sm:$0xff] %v227
    %230 = vrot.lane.b32.xlu0 %v66, 112
    %v231 = vpop.permute.xlu0 %230
    %232 = vrot.lane.b32.xlu0 %v67, 112
    %v233 = vpop.permute.xlu0 %232
    %vm234 = vcmp.lt.s32.totalorder %v73, 112
    %v235 = vsel %vm234, %v231, %v233
    %v236 = vsel %vm234, %v233, %v231
    %s237 = scalar_lea.vmem [#allocation10], 7
    %v238 = vld [vmem:[%s237] ss:$8 sm:$0x3]
    %v240 = vlaneseq
    %v241 = vshrl.u32 %v240, 7
    %v242 = vsub.s32 0, %v241
    %v243 = vrot.slane %v238, %v242
    %v244 = vlaneseq
    %v245 = vshrl.u32 %v244, 7
    %v246 = vsub.s32 1, %v245
    %v247 = vrot.slane %v238, %v246
    %v250 = vmul.f32 %v235, %v243
    %v251 = vmul.f32 %v236, %v247
    %252 = vst [vmem:[#allocation2 + $0xe0] sm:$0xff] %v250
    %253 = vst [vmem:[#allocation2 + $0xe8] sm:$0xff] %v251
    %254 = vrot.lane.b32.xlu0 %v66, 111
    %v255 = vpop.permute.xlu0 %254
    %256 = vrot.lane.b32.xlu0 %v67, 111
    %v257 = vpop.permute.xlu0 %256
    %vm258 = vcmp.lt.s32.totalorder %v73, 111
    %v259 = vsel %vm258, %v255, %v257
    %v260 = vsel %vm258, %v257, %v255
    %s261 = scalar_lea.vmem [#allocation10], 16
    %v262 = vld [vmem:[%s261] ss:$8 sm:$0x3]
    %v264 = vlaneseq
    %v265 = vshrl.u32 %v264, 7
    %v266 = vsub.s32 0, %v265
    %v267 = vrot.slane %v262, %v266
    %v268 = vlaneseq
    %v269 = vshrl.u32 %v268, 7
    %v270 = vsub.s32 1, %v269
    %v271 = vrot.slane %v262, %v270
    %v274 = vmul.f32 %v259, %v267
    %v275 = vmul.f32 %v260, %v271
    %276 = vst [vmem:[#allocation2 + $0x100] sm:$0xff] %v274
    %277 = vst [vmem:[#allocation2 + $0x108] sm:$0xff] %v275
    %s278 = scalar_lea.vmem [#allocation5], 8
    %v279 = vld [vmem:[%s278] sm:$0xff]
    %v281 = vcombine.high %v279, %v279
    %v283 = vsel %vm65, %v279, 0.0
    %v284 = vsel %vm65, %v281, 0.0
    %285 = vrot.lane.b32.xlu0 %v283, 17
    %v286 = vpop.permute.xlu0 %285
    %287 = vrot.lane.b32.xlu0 %v284, 17
    %v288 = vpop.permute.xlu0 %287
    %v289 = vsel %vm74, %v286, %v288
    %v290 = vsel %vm74, %v288, %v286
    %v291 = vld [vmem:[#allocation10] ss:$8 sm:$0x3]
    %v293 = vlaneseq
    %v294 = vshrl.u32 %v293, 7
    %v295 = vsub.s32 0, %v294
    %v296 = vrot.slane %v291, %v295
    %v297 = vlaneseq
    %v298 = vshrl.u32 %v297, 7
    %v299 = vsub.s32 1, %v298
    %v300 = vrot.slane %v291, %v299
    %v303 = vmul.f32 %v290, %v296
    %v304 = vmul.f32 %v289, %v300
    %305 = vst [vmem:[#allocation2 + $0x10] sm:$0xff] %v303
    %306 = vst [vmem:[#allocation2 + $0x18] sm:$0xff] %v304
    %307 = vrot.lane.b32.xlu0 %v283, 16
    %v308 = vpop.permute.xlu0 %307
    %309 = vrot.lane.b32.xlu0 %v284, 16
    %v310 = vpop.permute.xlu0 %309
    %v311 = vsel %vm97, %v308, %v310
    %v312 = vsel %vm97, %v310, %v308
    %v313 = vld [vmem:[%s100] ss:$8 sm:$0x3]
    %v315 = vlaneseq
    %v316 = vshrl.u32 %v315, 7
    %v317 = vsub.s32 0, %v316
    %v318 = vrot.slane %v313, %v317
    %v319 = vlaneseq
    %v320 = vshrl.u32 %v319, 7
    %v321 = vsub.s32 1, %v320
    %v322 = vrot.slane %v313, %v321
    %v325 = vmul.f32 %v312, %v318
    %v326 = vmul.f32 %v311, %v322
    %327 = vst [vmem:[#allocation2 + $0x30] sm:$0xff] %v325
    %328 = vst [vmem:[#allocation2 + $0x38] sm:$0xff] %v326
    %329 = vrot.lane.b32.xlu0 %v283, 15
    %v330 = vpop.permute.xlu0 %329
    %331 = vrot.lane.b32.xlu0 %v284, 15
    %v332 = vpop.permute.xlu0 %331
    %v333 = vsel %vm121, %v330, %v332
    %v334 = vsel %vm121, %v332, %v330
    %v335 = vld [vmem:[%s124] ss:$8 sm:$0x3]
    %v337 = vlaneseq
    %v338 = vshrl.u32 %v337, 7
    %v339 = vsub.s32 0, %v338
    %v340 = vrot.slane %v335, %v339
    %v341 = vlaneseq
    %v342 = vshrl.u32 %v341, 7
    %v343 = vsub.s32 1, %v342
    %v344 = vrot.slane %v335, %v343
    %v347 = vmul.f32 %v334, %v340
    %v348 = vmul.f32 %v333, %v344
    %349 = vst [vmem:[#allocation2 + $0x50] sm:$0xff] %v347
    %350 = vst [vmem:[#allocation2 + $0x58] sm:$0xff] %v348
    %351 = vrot.lane.b32.xlu0 %v283, 1
    %v352 = vpop.permute.xlu0 %351
    %353 = vrot.lane.b32.xlu0 %v284, 1
    %v354 = vpop.permute.xlu0 %353
    %v355 = vsel %vm145, %v352, %v354
    %v356 = vsel %vm145, %v354, %v352
    %v357 = vld [vmem:[%s148] ss:$8 sm:$0x3]
    %v359 = vlaneseq
    %v360 = vshrl.u32 %v359, 7
    %v361 = vsub.s32 0, %v360
    %v362 = vrot.slane %v357, %v361
    %v363 = vlaneseq
    %v364 = vshrl.u32 %v363, 7
    %v365 = vsub.s32 1, %v364
    %v366 = vrot.slane %v357, %v365
    %v369 = vmul.f32 %v356, %v362
    %v370 = vmul.f32 %v355, %v366
    %371 = vst [vmem:[#allocation2 + $0x70] sm:$0xff] %v369
    %372 = vst [vmem:[#allocation2 + $0x78] sm:$0xff] %v370
    %v373 = vld [vmem:[%s165] ss:$8 sm:$0x3]
    %v375 = vlaneseq
    %v376 = vshrl.u32 %v375, 7
    %v377 = vsub.s32 0, %v376
    %v378 = vrot.slane %v373, %v377
    %v379 = vlaneseq
    %v380 = vshrl.u32 %v379, 7
    %v381 = vsub.s32 1, %v380
    %v382 = vrot.slane %v373, %v381
    %v385 = vmul.f32 %v283, %v378
    %v386 = vmul.f32 %v284, %v382
    %387 = vst [vmem:[#allocation2 + $0x90] sm:$0xff] %v385
    %388 = vst [vmem:[#allocation2 + $0x98] sm:$0xff] %v386
    %389 = vrot.lane.b32.xlu0 %v283, 127
    %v390 = vpop.permute.xlu0 %389
    %391 = vrot.lane.b32.xlu0 %v284, 127
    %v392 = vpop.permute.xlu0 %391
    %v393 = vsel %vm186, %v390, %v392
    %v394 = vsel %vm186, %v392, %v390
    %v395 = vld [vmem:[%s189] ss:$8 sm:$0x3]
    %v397 = vlaneseq
    %v398 = vshrl.u32 %v397, 7
    %v399 = vsub.s32 0, %v398
    %v400 = vrot.slane %v395, %v399
    %v401 = vlaneseq
    %v402 = vshrl.u32 %v401, 7
    %v403 = vsub.s32 1, %v402
    %v404 = vrot.slane %v395, %v403
    %v407 = vmul.f32 %v393, %v400
    %v408 = vmul.f32 %v394, %v404
    %409 = vst [vmem:[#allocation2 + $0xb0] sm:$0xff] %v407
    %410 = vst [vmem:[#allocation2 + $0xb8] sm:$0xff] %v408
    %411 = vrot.lane.b32.xlu0 %v283, 113
    %v412 = vpop.permute.xlu0 %411
    %413 = vrot.lane.b32.xlu0 %v284, 113
    %v414 = vpop.permute.xlu0 %413
    %v415 = vsel %vm210, %v412, %v414
    %v416 = vsel %vm210, %v414, %v412
    %v417 = vld [vmem:[%s213] ss:$8 sm:$0x3]
    %v419 = vlaneseq
    %v420 = vshrl.u32 %v419, 7
    %v421 = vsub.s32 0, %v420
    %v422 = vrot.slane %v417, %v421
    %v423 = vlaneseq
    %v424 = vshrl.u32 %v423, 7
    %v425 = vsub.s32 1, %v424
    %v426 = vrot.slane %v417, %v425
    %v429 = vmul.f32 %v415, %v422
    %v430 = vmul.f32 %v416, %v426
    %431 = vst [vmem:[#allocation2 + $0xd0] sm:$0xff] %v429
    %432 = vst [vmem:[#allocation2 + $0xd8] sm:$0xff] %v430
    %433 = vrot.lane.b32.xlu0 %v283, 112
    %v434 = vpop.permute.xlu0 %433
    %435 = vrot.lane.b32.xlu0 %v284, 112
    %v436 = vpop.permute.xlu0 %435
    %v437 = vsel %vm234, %v434, %v436
    %v438 = vsel %vm234, %v436, %v434
    %v439 = vld [vmem:[%s237] ss:$8 sm:$0x3]
    %v441 = vlaneseq
    %v442 = vshrl.u32 %v441, 7
    %v443 = vsub.s32 0, %v442
    %v444 = vrot.slane %v439, %v443
    %v445 = vlaneseq
    %v446 = vshrl.u32 %v445, 7
    %v447 = vsub.s32 1, %v446
    %v448 = vrot.slane %v439, %v447
    %v451 = vmul.f32 %v437, %v444
    %v452 = vmul.f32 %v438, %v448
    %453 = vst [vmem:[#allocation2 + $0xf0] sm:$0xff] %v451
    %454 = vst [vmem:[#allocation2 + $0xf8] sm:$0xff] %v452
    %455 = vrot.lane.b32.xlu0 %v283, 111
    %v456 = vpop.permute.xlu0 %455
    %457 = vrot.lane.b32.xlu0 %v284, 111
    %v458 = vpop.permute.xlu0 %457
    %v459 = vsel %vm258, %v456, %v458
    %v460 = vsel %vm258, %v458, %v456
    %v461 = vld [vmem:[%s261] ss:$8 sm:$0x3]
    %v463 = vlaneseq
    %v464 = vshrl.u32 %v463, 7
    %v465 = vsub.s32 0, %v464
    %v466 = vrot.slane %v461, %v465
    %v467 = vlaneseq
    %v468 = vshrl.u32 %v467, 7
    %v469 = vsub.s32 1, %v468
    %v470 = vrot.slane %v461, %v469
    %v473 = vmul.f32 %v459, %v466
    %v474 = vmul.f32 %v460, %v470
    %475 = vst [vmem:[#allocation2 + $0x110] sm:$0xff] %v473
    %476 = vst [vmem:[#allocation2 + $0x118] sm:$0xff] %v474
    %v477 = vld [vmem:[%s1] sm:$0xff]
    %v478 = vld [vmem:[#allocation2] sm:$0xff]
    %v479 = vld [vmem:[#allocation2 + $0x8] sm:$0xff]
    %v480 = vld [vmem:[#allocation2 + $0x10] sm:$0xff]
    %v481 = vld [vmem:[#allocation2 + $0x18] sm:$0xff]
    %v482 = vld [vmem:[#allocation2 + $0x20] sm:$0xff]
    %v483 = vld [vmem:[#allocation2 + $0x28] sm:$0xff]
    %v484 = vld [vmem:[#allocation2 + $0x30] sm:$0xff]
    %v485 = vld [vmem:[#allocation2 + $0x38] sm:$0xff]
    %v486 = vld [vmem:[#allocation2 + $0x40] sm:$0xff]
    %v487 = vld [vmem:[#allocation2 + $0x48] sm:$0xff]
    %v488 = vld [vmem:[#allocation2 + $0x50] sm:$0xff]
    %v489 = vld [vmem:[#allocation2 + $0x58] sm:$0xff]
    %v490 = vld [vmem:[#allocation2 + $0x60] sm:$0xff]
    %v491 = vld [vmem:[#allocation2 + $0x68] sm:$0xff]
    %v492 = vld [vmem:[#allocation2 + $0x70] sm:$0xff]
    %v493 = vld [vmem:[#allocation2 + $0x78] sm:$0xff]
    %v494 = vld [vmem:[#allocation2 + $0x80] sm:$0xff]
    %v495 = vld [vmem:[#allocation2 + $0x88] sm:$0xff]
    %v496 = vld [vmem:[#allocation2 + $0x90] sm:$0xff]
    %v497 = vld [vmem:[#allocation2 + $0x98] sm:$0xff]
    %v498 = vld [vmem:[#allocation2 + $0xa0] sm:$0xff]
    %v499 = vld [vmem:[#allocation2 + $0xa8] sm:$0xff]
    %v500 = vld [vmem:[#allocation2 + $0xb0] sm:$0xff]
    %v501 = vld [vmem:[#allocation2 + $0xb8] sm:$0xff]
    %v502 = vld [vmem:[#allocation2 + $0xc0] sm:$0xff]
    %v503 = vld [vmem:[#allocation2 + $0xc8] sm:$0xff]
    %v504 = vld [vmem:[#allocation2 + $0xd0] sm:$0xff]
    %v505 = vld [vmem:[#allocation2 + $0xd8] sm:$0xff]
    %v506 = vld [vmem:[#allocation2 + $0xe0] sm:$0xff]
    %v507 = vld [vmem:[#allocation2 + $0xe8] sm:$0xff]
    %v508 = vld [vmem:[#allocation2 + $0xf0] sm:$0xff]
    %v509 = vld [vmem:[#allocation2 + $0xf8] sm:$0xff]
    %v510 = vld [vmem:[#allocation2 + $0x100] sm:$0xff]
    %v511 = vld [vmem:[#allocation2 + $0x108] sm:$0xff]
    %v512 = vld [vmem:[#allocation2 + $0x110] sm:$0xff]
    %v513 = vld [vmem:[#allocation2 + $0x118] sm:$0xff]
    %vm514 = vcmask 588800
    %v516 = vsel %vm514, %v477, 0
    %518 = vmatprep.subr.mxu0 0.0
    %519 = vmatpush1.msra.mxu0 0.0
    %520 = vmatprep.subr.mxu0 0.0
    %521 = vmatpush1.msra.mxu0 0.0
    %522 = vmatprep.subr.mxu0 0.0
    %523 = vmatpush1.msra.mxu0 0.0
    %524 = vmatprep.subr.mxu0 0.0
    %525 = vmatpush1.msra.mxu0 0.0
    %526 = vmatprep.subr.mxu0 0.0
    %527 = vmatpush1.msra.mxu0 0.0
    %528 = vmatprep.subr.mxu0 0.0
    %529 = vmatpush1.msra.mxu0 0.0
    %530 = vmatprep.subr.mxu0 0.0
    %531 = vmatpush1.msra.mxu0 0.0
    %532 = vmatprep.subr.mxu0 %v511
    %533 = vmatpush1.msra.mxu0 %v510
    %534 = vmatprep.subr.mxu0 %v507
    %535 = vmatpush1.msra.mxu0 %v506
    %536 = vmatprep.subr.mxu0 %v503
    %537 = vmatpush1.msra.mxu0 %v502
    %538 = vmatprep.subr.mxu0 %v499
    %539 = vmatpush1.msra.mxu0 %v498
    %540 = vmatprep.subr.mxu0 %v495
    %541 = vmatpush1.msra.mxu0 %v494
    %542 = vmatprep.subr.mxu0 %v491
    %543 = vmatpush1.msra.mxu0 %v490
    %544 = vmatprep.subr.mxu0 %v487
    %545 = vmatpush1.msra.mxu0 %v486
    %546 = vmatprep.subr.mxu0 %v483
    %547 = vmatpush1.msra.mxu0 %v482
    %548 = vmatprep.subr.mxu0 %v479
    %549 = vmatpush1.msra.mxu0 %v478
    %550 = vmatprep.subr.mxu0 0.0
    %551 = vmatpush2.msra.mxu0 0.0
    %552 = vmatprep.subr.mxu0 0.0
    %553 = vmatpush2.msra.mxu0 0.0
    %554 = vmatprep.subr.mxu0 0.0
    %555 = vmatpush2.msra.mxu0 0.0
    %556 = vmatprep.subr.mxu0 0.0
    %557 = vmatpush2.msra.mxu0 0.0
    %558 = vmatprep.subr.mxu0 0.0
    %559 = vmatpush2.msra.mxu0 0.0
    %560 = vmatprep.subr.mxu0 0.0
    %561 = vmatpush2.msra.mxu0 0.0
    %562 = vmatprep.subr.mxu0 0.0
    %563 = vmatpush2.msra.mxu0 0.0
    %564 = vmatprep.subr.mxu0 0.0
    %565 = vmatpush2.msra.mxu0 0.0
    %566 = vmatprep.subr.mxu0 0.0
    %567 = vmatpush2.msra.mxu0 0.0
    %568 = vmatprep.subr.mxu0 0.0
    %569 = vmatpush2.msra.mxu0 0.0
    %570 = vmatprep.subr.mxu0 0.0
    %571 = vmatpush2.msra.mxu0 0.0
    %572 = vmatprep.subr.mxu0 0.0
    %573 = vmatpush2.msra.mxu0 0.0
    %574 = vmatprep.subr.mxu0 0.0
    %575 = vmatpush2.msra.mxu0 0.0
    %576 = vmatprep.subr.mxu0 0.0
    %577 = vmatpush2.msra.mxu0 0.0
    %578 = vmatprep.subr.mxu0 0.0
    %579 = vmatpush2.msra.mxu0 0.0
    %580 = vmatprep.subr.mxu0 0.0
    %581 = vmatpush2.msra.mxu0 0.0
    %582 = vmatprep.mubr.f32.mxu0 0.0
    %583 = vmatmul.mubr.f32.gmra.mxu0 %v516
    %v584 = vpop.f32.mrf.mxu0
    %v585 = vadd.f32 0.0, %v584
    %v586 = vpop.f32.mrf.mxu0
    %v587 = vadd.f32 0.0, %v586
    %588 = vdwg.mxu0
    %589 = vmatprep.subr.mxu0 0.0
    %590 = vmatpush1.msra.mxu0 0.0
    %591 = vmatprep.subr.mxu0 0.0
    %592 = vmatpush1.msra.mxu0 0.0
    %593 = vmatprep.subr.mxu0 0.0
    %594 = vmatpush1.msra.mxu0 0.0
    %595 = vmatprep.subr.mxu0 0.0
    %596 = vmatpush1.msra.mxu0 0.0
    %597 = vmatprep.subr.mxu0 0.0
    %598 = vmatpush1.msra.mxu0 0.0
    %599 = vmatprep.subr.mxu0 0.0
    %600 = vmatpush1.msra.mxu0 0.0
    %601 = vmatprep.subr.mxu0 0.0
    %602 = vmatpush1.msra.mxu0 0.0
    %603 = vmatprep.subr.mxu0 %v513
    %604 = vmatpush1.msra.mxu0 %v512
    %605 = vmatprep.subr.mxu0 %v509
    %606 = vmatpush1.msra.mxu0 %v508
    %607 = vmatprep.subr.mxu0 %v505
    %608 = vmatpush1.msra.mxu0 %v504
    %609 = vmatprep.subr.mxu0 %v501
    %610 = vmatpush1.msra.mxu0 %v500
    %611 = vmatprep.subr.mxu0 %v497
    %612 = vmatpush1.msra.mxu0 %v496
    %613 = vmatprep.subr.mxu0 %v493
    %614 = vmatpush1.msra.mxu0 %v492
    %615 = vmatprep.subr.mxu0 %v489
    %616 = vmatpush1.msra.mxu0 %v488
    %617 = vmatprep.subr.mxu0 %v485
    %618 = vmatpush1.msra.mxu0 %v484
    %619 = vmatprep.subr.mxu0 %v481
    %620 = vmatpush1.msra.mxu0 %v480
    %621 = vmatprep.subr.mxu0 0.0
    %622 = vmatpush2.msra.mxu0 0.0
    %623 = vmatprep.subr.mxu0 0.0
    %624 = vmatpush2.msra.mxu0 0.0
    %625 = vmatprep.subr.mxu0 0.0
    %626 = vmatpush2.msra.mxu0 0.0
    %627 = vmatprep.subr.mxu0 0.0
    %628 = vmatpush2.msra.mxu0 0.0
    %629 = vmatprep.subr.mxu0 0.0
    %630 = vmatpush2.msra.mxu0 0.0
    %631 = vmatprep.subr.mxu0 0.0
    %632 = vmatpush2.msra.mxu0 0.0
    %633 = vmatprep.subr.mxu0 0.0
    %634 = vmatpush2.msra.mxu0 0.0
    %635 = vmatprep.subr.mxu0 0.0
    %636 = vmatpush2.msra.mxu0 0.0
    %637 = vmatprep.subr.mxu0 0.0
    %638 = vmatpush2.msra.mxu0 0.0
    %639 = vmatprep.subr.mxu0 0.0
    %640 = vmatpush2.msra.mxu0 0.0
    %641 = vmatprep.subr.mxu0 0.0
    %642 = vmatpush2.msra.mxu0 0.0
    %643 = vmatprep.subr.mxu0 0.0
    %644 = vmatpush2.msra.mxu0 0.0
    %645 = vmatprep.subr.mxu0 0.0
    %646 = vmatpush2.msra.mxu0 0.0
    %647 = vmatprep.subr.mxu0 0.0
    %648 = vmatpush2.msra.mxu0 0.0
    %649 = vmatprep.subr.mxu0 0.0
    %650 = vmatpush2.msra.mxu0 0.0
    %651 = vmatprep.subr.mxu0 0.0
    %652 = vmatpush2.msra.mxu0 0.0
    %653 = vmatprep.mubr.f32.mxu0 0.0
    %654 = vmatmul.mubr.f32.gmra.mxu0 %v516
    %v655 = vpop.f32.mrf.mxu0
    %v656 = vadd.f32 0.0, %v655
    %v657 = vpop.f32.mrf.mxu0
    %v658 = vadd.f32 0.0, %v657
    %659 = vdwg.mxu0
    %v660 = vadd.f32 %v585, %v587
    %661 = vadd.xlane.f32.xlu0 %v660
    %v662 = vpop.xlane.xlu0 %661
    %v663 = vmul.f32 %v662, 0.00390625
    %v664 = vmul.f32 %v585, %v585
    %v665 = vmul.f32 %v587, %v587
    %v666 = vadd.f32 %v664, %v665
    %667 = vadd.xlane.f32.xlu0 %v666
    %v668 = vpop.xlane.xlu0 %667
    %v669 = vmul.f32 %v668, 0.00390625
    %v670 = vmul.f32 %v663, %v663
    %v671 = vsub.f32 %v669, %v670
    %v672 = vmax.f32 %v671, 0.0
    %v673 = vsub.f32 %v585, %v663
    %v674 = vsub.f32 %v587, %v663
    %v675 = vadd.f32 %v672, 1e-05
    %v676 = vrsqrt.pop %v675
    %v677 = vmul.f32 %v673, %v676
    %v678 = vmul.f32 %v674, %v676
    %680 = vset.pattern.permute.xlu0 0
    %681 = vperm.xlu0 %680, %v60
    %v682 = vpop.permute.xlu0 %681
    %v684 = vmul.f32 %v677, %v682
    %v685 = vmul.f32 %v678, %v682
    %686 = vset.pattern.permute.xlu0 1
    %687 = vperm.xlu0 %686, %v60
    %v688 = vpop.permute.xlu0 %687
    %v690 = vadd.f32 %v684, %v688
    %v691 = vadd.f32 %v685, %v688
    %vm692 = vcmp.ge.f32.partialorder %v690, 0.0
    %vm693 = vcmp.ge.f32.partialorder %v691, 0.0
    %v694 = vmul.f32 %v690, 0.2
    %v695 = vmul.f32 %v691, 0.2
    %v696 = vsel %vm692, %v690, %v694
    %v697 = vsel %vm693, %v691, %v695
    %698 = vst [vmem:[#allocation4] sm:$0xff] %v696
    %699 = vst [vmem:[#allocation4 + $0x8] sm:$0xff] %v697
    %v700 = vadd.f32 %v656, %v658
    %701 = vadd.xlane.f32.xlu0 %v700
    %v702 = vpop.xlane.xlu0 %701
    %v703 = vmul.f32 %v702, 0.00390625
    %v704 = vmul.f32 %v656, %v656
    %v705 = vmul.f32 %v658, %v658
    %v706 = vadd.f32 %v704, %v705
    %707 = vadd.xlane.f32.xlu0 %v706
    %v708 = vpop.xlane.xlu0 %707
    %v709 = vmul.f32 %v708, 0.00390625
    %v710 = vmul.f32 %v703, %v703
    %v711 = vsub.f32 %v709, %v710
    %v712 = vmax.f32 %v711, 0.0
    %v713 = vsub.f32 %v656, %v703
    %v714 = vsub.f32 %v658, %v703
    %v715 = vadd.f32 %v712, 1e-05
    %v716 = vrsqrt.pop %v715
    %v717 = vmul.f32 %v713, %v716
    %v718 = vmul.f32 %v714, %v716
    %v719 = vmul.f32 %v717, %v682
    %v720 = vmul.f32 %v718, %v682
    %v721 = vadd.f32 %v719, %v688
    %v722 = vadd.f32 %v720, %v688
    %vm723 = vcmp.ge.f32.partialorder %v721, 0.0
    %vm724 = vcmp.ge.f32.partialorder %v722, 0.0
    %v725 = vmul.f32 %v721, 0.2
    %v726 = vmul.f32 %v722, 0.2
    %v727 = vsel %vm723, %v721, %v725
    %v728 = vsel %vm724, %v722, %v726
    %729 = vst [vmem:[#allocation4 + $0x10] sm:$0xff] %v727
    %730 = vst [vmem:[#allocation4 + $0x18] sm:$0xff] %v728
    %v731 = vld [vmem:[#allocation4] sm:$0xff]
    %v732 = vld [vmem:[#allocation4 + $0x8] sm:$0xff]
    %733 = vrot.lane.b32.xlu0 %v731, 17
    %v734 = vpop.permute.xlu0 %733
    %735 = vrot.lane.b32.xlu0 %v732, 17
    %v736 = vpop.permute.xlu0 %735
    %v737 = vsel %vm74, %v734, %v736
    %v738 = vsel %vm74, %v736, %v734
    %v739 = vld [vmem:[#allocation10] ss:$8 sm:$0x3]
    %v741 = vlaneseq
    %v742 = vshrl.u32 %v741, 7
    %v743 = vsub.s32 0, %v742
    %v744 = vrot.slane %v739, %v743
    %v745 = vlaneseq
    %v746 = vshrl.u32 %v745, 7
    %v747 = vsub.s32 1, %v746
    %v748 = vrot.slane %v739, %v747
    %v751 = vmul.f32 %v738, %v744
    %v752 = vmul.f32 %v737, %v748
    %753 = vst [vmem:[#allocation3] sm:$0xff] %v751
    %754 = vst [vmem:[#allocation3 + $0x8] sm:$0xff] %v752
    %755 = vrot.lane.b32.xlu0 %v731, 16
    %v756 = vpop.permute.xlu0 %755
    %757 = vrot.lane.b32.xlu0 %v732, 16
    %v758 = vpop.permute.xlu0 %757
    %v759 = vsel %vm97, %v756, %v758
    %v760 = vsel %vm97, %v758, %v756
    %v761 = vld [vmem:[%s100] ss:$8 sm:$0x3]
    %v763 = vlaneseq
    %v764 = vshrl.u32 %v763, 7
    %v765 = vsub.s32 0, %v764
    %v766 = vrot.slane %v761, %v765
    %v767 = vlaneseq
    %v768 = vshrl.u32 %v767, 7
    %v769 = vsub.s32 1, %v768
    %v770 = vrot.slane %v761, %v769
    %v773 = vmul.f32 %v760, %v766
    %v774 = vmul.f32 %v759, %v770
    %775 = vst [vmem:[#allocation3 + $0x20] sm:$0xff] %v773
    %776 = vst [vmem:[#allocation3 + $0x28] sm:$0xff] %v774
    %777 = vrot.lane.b32.xlu0 %v731, 15
    %v778 = vpop.permute.xlu0 %777
    %779 = vrot.lane.b32.xlu0 %v732, 15
    %v780 = vpop.permute.xlu0 %779
    %v781 = vsel %vm121, %v778, %v780
    %v782 = vsel %vm121, %v780, %v778
    %v783 = vld [vmem:[%s124] ss:$8 sm:$0x3]
    %v785 = vlaneseq
    %v786 = vshrl.u32 %v785, 7
    %v787 = vsub.s32 0, %v786
    %v788 = vrot.slane %v783, %v787
    %v789 = vlaneseq
    %v790 = vshrl.u32 %v789, 7
    %v791 = vsub.s32 1, %v790
    %v792 = vrot.slane %v783, %v791
    %v795 = vmul.f32 %v782, %v788
    %v796 = vmul.f32 %v781, %v792
    %797 = vst [vmem:[#allocation3 + $0x40] sm:$0xff] %v795
    %798 = vst [vmem:[#allocation3 + $0x48] sm:$0xff] %v796
    %799 = vrot.lane.b32.xlu0 %v731, 1
    %v800 = vpop.permute.xlu0 %799
    %801 = vrot.lane.b32.xlu0 %v732, 1
    %v802 = vpop.permute.xlu0 %801
    %v803 = vsel %vm145, %v800, %v802
    %v804 = vsel %vm145, %v802, %v800
    %v805 = vld [vmem:[%s148] ss:$8 sm:$0x3]
    %v807 = vlaneseq
    %v808 = vshrl.u32 %v807, 7
    %v809 = vsub.s32 0, %v808
    %v810 = vrot.slane %v805, %v809
    %v811 = vlaneseq
    %v812 = vshrl.u32 %v811, 7
    %v813 = vsub.s32 1, %v812
    %v814 = vrot.slane %v805, %v813
    %v817 = vmul.f32 %v804, %v810
    %v818 = vmul.f32 %v803, %v814
    %819 = vst [vmem:[#allocation3 + $0x60] sm:$0xff] %v817
    %820 = vst [vmem:[#allocation3 + $0x68] sm:$0xff] %v818
    %v821 = vld [vmem:[%s165] ss:$8 sm:$0x3]
    %v823 = vlaneseq
    %v824 = vshrl.u32 %v823, 7
    %v825 = vsub.s32 0, %v824
    %v826 = vrot.slane %v821, %v825
    %v827 = vlaneseq
    %v828 = vshrl.u32 %v827, 7
    %v829 = vsub.s32 1, %v828
    %v830 = vrot.slane %v821, %v829
    %v833 = vmul.f32 %v731, %v826
    %v834 = vmul.f32 %v732, %v830
    %835 = vst [vmem:[#allocation3 + $0x80] sm:$0xff] %v833
    %836 = vst [vmem:[#allocation3 + $0x88] sm:$0xff] %v834
    %837 = vrot.lane.b32.xlu0 %v731, 127
    %v838 = vpop.permute.xlu0 %837
    %839 = vrot.lane.b32.xlu0 %v732, 127
    %v840 = vpop.permute.xlu0 %839
    %v841 = vsel %vm186, %v838, %v840
    %v842 = vsel %vm186, %v840, %v838
    %v843 = vld [vmem:[%s189] ss:$8 sm:$0x3]
    %v845 = vlaneseq
    %v846 = vshrl.u32 %v845, 7
    %v847 = vsub.s32 0, %v846
    %v848 = vrot.slane %v843, %v847
    %v849 = vlaneseq
    %v850 = vshrl.u32 %v849, 7
    %v851 = vsub.s32 1, %v850
    %v852 = vrot.slane %v843, %v851
    %v855 = vmul.f32 %v841, %v848
    %v856 = vmul.f32 %v842, %v852
    %857 = vst [vmem:[#allocation3 + $0xa0] sm:$0xff] %v855
    %858 = vst [vmem:[#allocation3 + $0xa8] sm:$0xff] %v856
    %859 = vrot.lane.b32.xlu0 %v731, 113
    %v860 = vpop.permute.xlu0 %859
    %861 = vrot.lane.b32.xlu0 %v732, 113
    %v862 = vpop.permute.xlu0 %861
    %v863 = vsel %vm210, %v860, %v862
    %v864 = vsel %vm210, %v862, %v860
    %v865 = vld [vmem:[%s213] ss:$8 sm:$0x3]
    %v867 = vlaneseq
    %v868 = vshrl.u32 %v867, 7
    %v869 = vsub.s32 0, %v868
    %v870 = vrot.slane %v865, %v869
    %v871 = vlaneseq
    %v872 = vshrl.u32 %v871, 7
    %v873 = vsub.s32 1, %v872
    %v874 = vrot.slane %v865, %v873
    %v877 = vmul.f32 %v863, %v870
    %v878 = vmul.f32 %v864, %v874
    %879 = vst [vmem:[#allocation3 + $0xc0] sm:$0xff] %v877
    %880 = vst [vmem:[#allocation3 + $0xc8] sm:$0xff] %v878
    %881 = vrot.lane.b32.xlu0 %v731, 112
    %v882 = vpop.permute.xlu0 %881
    %883 = vrot.lane.b32.xlu0 %v732, 112
    %v884 = vpop.permute.xlu0 %883
    %v885 = vsel %vm234, %v882, %v884
    %v886 = vsel %vm234, %v884, %v882
    %v887 = vld [vmem:[%s237] ss:$8 sm:$0x3]
    %v889 = vlaneseq
    %v890 = vshrl.u32 %v889, 7
    %v891 = vsub.s32 0, %v890
    %v892 = vrot.slane %v887, %v891
    %v893 = vlaneseq
    %v894 = vshrl.u32 %v893, 7
    %v895 = vsub.s32 1, %v894
    %v896 = vrot.slane %v887, %v895
    %v899 = vmul.f32 %v885, %v892
    %v900 = vmul.f32 %v886, %v896
    %901 = vst [vmem:[#allocation3 + $0xe0] sm:$0xff] %v899
    %902 = vst [vmem:[#allocation3 + $0xe8] sm:$0xff] %v900
    %903 = vrot.lane.b32.xlu0 %v731, 111
    %v904 = vpop.permute.xlu0 %903
    %905 = vrot.lane.b32.xlu0 %v732, 111
    %v906 = vpop.permute.xlu0 %905
    %v907 = vsel %vm258, %v904, %v906
    %v908 = vsel %vm258, %v906, %v904
    %v909 = vld [vmem:[%s261] ss:$8 sm:$0x3]
    %v911 = vlaneseq
    %v912 = vshrl.u32 %v911, 7
    %v913 = vsub.s32 0, %v912
    %v914 = vrot.slane %v909, %v913
    %v915 = vlaneseq
    %v916 = vshrl.u32 %v915, 7
    %v917 = vsub.s32 1, %v916
    %v918 = vrot.slane %v909, %v917
    %v921 = vmul.f32 %v907, %v914
    %v922 = vmul.f32 %v908, %v918
    %923 = vst [vmem:[#allocation3 + $0x100] sm:$0xff] %v921
    %924 = vst [vmem:[#allocation3 + $0x108] sm:$0xff] %v922
    %v925 = vld [vmem:[#allocation4 + $0x10] sm:$0xff]
    %v926 = vld [vmem:[#allocation4 + $0x18] sm:$0xff]
    %927 = vrot.lane.b32.xlu0 %v925, 17
    %v928 = vpop.permute.xlu0 %927
    %929 = vrot.lane.b32.xlu0 %v926, 17
    %v930 = vpop.permute.xlu0 %929
    %v931 = vsel %vm74, %v928, %v930
    %v932 = vsel %vm74, %v930, %v928
    %v933 = vld [vmem:[#allocation10] ss:$8 sm:$0x3]
    %v935 = vlaneseq
    %v936 = vshrl.u32 %v935, 7
    %v937 = vsub.s32 0, %v936
    %v938 = vrot.slane %v933, %v937
    %v939 = vlaneseq
    %v940 = vshrl.u32 %v939, 7
    %v941 = vsub.s32 1, %v940
    %v942 = vrot.slane %v933, %v941
    %v945 = vmul.f32 %v932, %v938
    %v946 = vmul.f32 %v931, %v942
    %947 = vst [vmem:[#allocation3 + $0x10] sm:$0xff] %v945
    %948 = vst [vmem:[#allocation3 + $0x18] sm:$0xff] %v946
    %949 = vrot.lane.b32.xlu0 %v925, 16
    %v950 = vpop.permute.xlu0 %949
    %951 = vrot.lane.b32.xlu0 %v926, 16
    %v952 = vpop.permute.xlu0 %951
    %v953 = vsel %vm97, %v950, %v952
    %v954 = vsel %vm97, %v952, %v950
    %v955 = vld [vmem:[%s100] ss:$8 sm:$0x3]
    %v957 = vlaneseq
    %v958 = vshrl.u32 %v957, 7
    %v959 = vsub.s32 0, %v958
    %v960 = vrot.slane %v955, %v959
    %v961 = vlaneseq
    %v962 = vshrl.u32 %v961, 7
    %v963 = vsub.s32 1, %v962
    %v964 = vrot.slane %v955, %v963
    %v967 = vmul.f32 %v954, %v960
    %v968 = vmul.f32 %v953, %v964
    %969 = vst [vmem:[#allocation3 + $0x30] sm:$0xff] %v967
    %970 = vst [vmem:[#allocation3 + $0x38] sm:$0xff] %v968
    %971 = vrot.lane.b32.xlu0 %v925, 15
    %v972 = vpop.permute.xlu0 %971
    %973 = vrot.lane.b32.xlu0 %v926, 15
    %v974 = vpop.permute.xlu0 %973
    %v975 = vsel %vm121, %v972, %v974
    %v976 = vsel %vm121, %v974, %v972
    %v977 = vld [vmem:[%s124] ss:$8 sm:$0x3]
    %v979 = vlaneseq
    %v980 = vshrl.u32 %v979, 7
    %v981 = vsub.s32 0, %v980
    %v982 = vrot.slane %v977, %v981
    %v983 = vlaneseq
    %v984 = vshrl.u32 %v983, 7
    %v985 = vsub.s32 1, %v984
    %v986 = vrot.slane %v977, %v985
    %v989 = vmul.f32 %v976, %v982
    %v990 = vmul.f32 %v975, %v986
    %991 = vst [vmem:[#allocation3 + $0x50] sm:$0xff] %v989
    %992 = vst [vmem:[#allocation3 + $0x58] sm:$0xff] %v990
    %993 = vrot.lane.b32.xlu0 %v925, 1
    %v994 = vpop.permute.xlu0 %993
    %995 = vrot.lane.b32.xlu0 %v926, 1
    %v996 = vpop.permute.xlu0 %995
    %v997 = vsel %vm145, %v994, %v996
    %v998 = vsel %vm145, %v996, %v994
    %v999 = vld [vmem:[%s148] ss:$8 sm:$0x3]
    %v1001 = vlaneseq
    %v1002 = vshrl.u32 %v1001, 7
    %v1003 = vsub.s32 0, %v1002
    %v1004 = vrot.slane %v999, %v1003
    %v1005 = vlaneseq
    %v1006 = vshrl.u32 %v1005, 7
    %v1007 = vsub.s32 1, %v1006
    %v1008 = vrot.slane %v999, %v1007
    %v1011 = vmul.f32 %v998, %v1004
    %v1012 = vmul.f32 %v997, %v1008
    %1013 = vst [vmem:[#allocation3 + $0x70] sm:$0xff] %v1011
    %1014 = vst [vmem:[#allocation3 + $0x78] sm:$0xff] %v1012
    %v1015 = vld [vmem:[%s165] ss:$8 sm:$0x3]
    %v1017 = vlaneseq
    %v1018 = vshrl.u32 %v1017, 7
    %v1019 = vsub.s32 0, %v1018
    %v1020 = vrot.slane %v1015, %v1019
    %v1021 = vlaneseq
    %v1022 = vshrl.u32 %v1021, 7
    %v1023 = vsub.s32 1, %v1022
    %v1024 = vrot.slane %v1015, %v1023
    %v1027 = vmul.f32 %v925, %v1020
    %v1028 = vmul.f32 %v926, %v1024
    %1029 = vst [vmem:[#allocation3 + $0x90] sm:$0xff] %v1027
    %1030 = vst [vmem:[#allocation3 + $0x98] sm:$0xff] %v1028
    %1031 = vrot.lane.b32.xlu0 %v925, 127
    %v1032 = vpop.permute.xlu0 %1031
    %1033 = vrot.lane.b32.xlu0 %v926, 127
    %v1034 = vpop.permute.xlu0 %1033
    %v1035 = vsel %vm186, %v1032, %v1034
    %v1036 = vsel %vm186, %v1034, %v1032
    %v1037 = vld [vmem:[%s189] ss:$8 sm:$0x3]
    %v1039 = vlaneseq
    %v1040 = vshrl.u32 %v1039, 7
    %v1041 = vsub.s32 0, %v1040
    %v1042 = vrot.slane %v1037, %v1041
    %v1043 = vlaneseq
    %v1044 = vshrl.u32 %v1043, 7
    %v1045 = vsub.s32 1, %v1044
    %v1046 = vrot.slane %v1037, %v1045
    %v1049 = vmul.f32 %v1035, %v1042
    %v1050 = vmul.f32 %v1036, %v1046
    %1051 = vst [vmem:[#allocation3 + $0xb0] sm:$0xff] %v1049
    %1052 = vst [vmem:[#allocation3 + $0xb8] sm:$0xff] %v1050
    %1053 = vrot.lane.b32.xlu0 %v925, 113
    %v1054 = vpop.permute.xlu0 %1053
    %1055 = vrot.lane.b32.xlu0 %v926, 113
    %v1056 = vpop.permute.xlu0 %1055
    %v1057 = vsel %vm210, %v1054, %v1056
    %v1058 = vsel %vm210, %v1056, %v1054
    %v1059 = vld [vmem:[%s213] ss:$8 sm:$0x3]
    %v1061 = vlaneseq
    %v1062 = vshrl.u32 %v1061, 7
    %v1063 = vsub.s32 0, %v1062
    %v1064 = vrot.slane %v1059, %v1063
    %v1065 = vlaneseq
    %v1066 = vshrl.u32 %v1065, 7
    %v1067 = vsub.s32 1, %v1066
    %v1068 = vrot.slane %v1059, %v1067
    %v1071 = vmul.f32 %v1057, %v1064
    %v1072 = vmul.f32 %v1058, %v1068
    %1073 = vst [vmem:[#allocation3 + $0xd0] sm:$0xff] %v1071
    %1074 = vst [vmem:[#allocation3 + $0xd8] sm:$0xff] %v1072
    %1075 = vrot.lane.b32.xlu0 %v925, 112
    %v1076 = vpop.permute.xlu0 %1075
    %1077 = vrot.lane.b32.xlu0 %v926, 112
    %v1078 = vpop.permute.xlu0 %1077
    %v1079 = vsel %vm234, %v1076, %v1078
    %v1080 = vsel %vm234, %v1078, %v1076
    %v1081 = vld [vmem:[%s237] ss:$8 sm:$0x3]
    %v1083 = vlaneseq
    %v1084 = vshrl.u32 %v1083, 7
    %v1085 = vsub.s32 0, %v1084
    %v1086 = vrot.slane %v1081, %v1085
    %v1087 = vlaneseq
    %v1088 = vshrl.u32 %v1087, 7
    %v1089 = vsub.s32 1, %v1088
    %v1090 = vrot.slane %v1081, %v1089
    %v1093 = vmul.f32 %v1079, %v1086
    %v1094 = vmul.f32 %v1080, %v1090
    %1095 = vst [vmem:[#allocation3 + $0xf0] sm:$0xff] %v1093
    %1096 = vst [vmem:[#allocation3 + $0xf8] sm:$0xff] %v1094
    %1097 = vrot.lane.b32.xlu0 %v925, 111
    %v1098 = vpop.permute.xlu0 %1097
    %1099 = vrot.lane.b32.xlu0 %v926, 111
    %v1100 = vpop.permute.xlu0 %1099
    %v1101 = vsel %vm258, %v1098, %v1100
    %v1102 = vsel %vm258, %v1100, %v1098
    %v1103 = vld [vmem:[%s261] ss:$8 sm:$0x3]
    %v1105 = vlaneseq
    %v1106 = vshrl.u32 %v1105, 7
    %v1107 = vsub.s32 0, %v1106
    %v1108 = vrot.slane %v1103, %v1107
    %v1109 = vlaneseq
    %v1110 = vshrl.u32 %v1109, 7
    %v1111 = vsub.s32 1, %v1110
    %v1112 = vrot.slane %v1103, %v1111
    %v1115 = vmul.f32 %v1101, %v1108
    %v1116 = vmul.f32 %v1102, %v1112
    %1117 = vst [vmem:[#allocation3 + $0x110] sm:$0xff] %v1115
    %1118 = vst [vmem:[#allocation3 + $0x118] sm:$0xff] %v1116
    %v1119 = vld [vmem:[#allocation8] sm:$0xff]
    %v1120 = vld [vmem:[#allocation3] sm:$0xff]
    %v1121 = vld [vmem:[#allocation3 + $0x8] sm:$0xff]
    %v1122 = vld [vmem:[#allocation3 + $0x10] sm:$0xff]
    %v1123 = vld [vmem:[#allocation3 + $0x18] sm:$0xff]
    %v1124 = vld [vmem:[#allocation3 + $0x20] sm:$0xff]
    %v1125 = vld [vmem:[#allocation3 + $0x28] sm:$0xff]
    %v1126 = vld [vmem:[#allocation3 + $0x30] sm:$0xff]
    %v1127 = vld [vmem:[#allocation3 + $0x38] sm:$0xff]
    %v1128 = vld [vmem:[#allocation3 + $0x40] sm:$0xff]
    %v1129 = vld [vmem:[#allocation3 + $0x48] sm:$0xff]
    %v1130 = vld [vmem:[#allocation3 + $0x50] sm:$0xff]
    %v1131 = vld [vmem:[#allocation3 + $0x58] sm:$0xff]
    %v1132 = vld [vmem:[#allocation3 + $0x60] sm:$0xff]
    %v1133 = vld [vmem:[#allocation3 + $0x68] sm:$0xff]
    %v1134 = vld [vmem:[#allocation3 + $0x70] sm:$0xff]
    %v1135 = vld [vmem:[#allocation3 + $0x78] sm:$0xff]
    %v1136 = vld [vmem:[#allocation3 + $0x80] sm:$0xff]
    %v1137 = vld [vmem:[#allocation3 + $0x88] sm:$0xff]
    %v1138 = vld [vmem:[#allocation3 + $0x90] sm:$0xff]
    %v1139 = vld [vmem:[#allocation3 + $0x98] sm:$0xff]
    %v1140 = vld [vmem:[#allocation3 + $0xa0] sm:$0xff]
    %v1141 = vld [vmem:[#allocation3 + $0xa8] sm:$0xff]
    %v1142 = vld [vmem:[#allocation3 + $0xb0] sm:$0xff]
    %v1143 = vld [vmem:[#allocation3 + $0xb8] sm:$0xff]
    %v1144 = vld [vmem:[#allocation3 + $0xc0] sm:$0xff]
    %v1145 = vld [vmem:[#allocation3 + $0xc8] sm:$0xff]
    %v1146 = vld [vmem:[#allocation3 + $0xd0] sm:$0xff]
    %v1147 = vld [vmem:[#allocation3 + $0xd8] sm:$0xff]
    %v1148 = vld [vmem:[#allocation3 + $0xe0] sm:$0xff]
    %v1149 = vld [vmem:[#allocation3 + $0xe8] sm:$0xff]
    %v1150 = vld [vmem:[#allocation3 + $0xf0] sm:$0xff]
    %v1151 = vld [vmem:[#allocation3 + $0xf8] sm:$0xff]
    %v1152 = vld [vmem:[#allocation3 + $0x100] sm:$0xff]
    %v1153 = vld [vmem:[#allocation3 + $0x108] sm:$0xff]
    %v1154 = vld [vmem:[#allocation3 + $0x110] sm:$0xff]
    %v1155 = vld [vmem:[#allocation3 + $0x118] sm:$0xff]
    %v1157 = vsel %vm514, %v1119, 0
    %1159 = vmatprep.subr.mxu0 0.0
    %1160 = vmatpush1.msra.mxu0 0.0
    %1161 = vmatprep.subr.mxu0 0.0
    %1162 = vmatpush1.msra.mxu0 0.0
    %1163 = vmatprep.subr.mxu0 0.0
    %1164 = vmatpush1.msra.mxu0 0.0
    %1165 = vmatprep.subr.mxu0 0.0
    %1166 = vmatpush1.msra.mxu0 0.0
    %1167 = vmatprep.subr.mxu0 0.0
    %1168 = vmatpush1.msra.mxu0 0.0
    %1169 = vmatprep.subr.mxu0 0.0
    %1170 = vmatpush1.msra.mxu0 0.0
    %1171 = vmatprep.subr.mxu0 0.0
    %1172 = vmatpush1.msra.mxu0 0.0
    %1173 = vmatprep.subr.mxu0 %v1153
    %1174 = vmatpush1.msra.mxu0 %v1152
    %1175 = vmatprep.subr.mxu0 %v1149
    %1176 = vmatpush1.msra.mxu0 %v1148
    %1177 = vmatprep.subr.mxu0 %v1145
    %1178 = vmatpush1.msra.mxu0 %v1144
    %1179 = vmatprep.subr.mxu0 %v1141
    %1180 = vmatpush1.msra.mxu0 %v1140
    %1181 = vmatprep.subr.mxu0 %v1137
    %1182 = vmatpush1.msra.mxu0 %v1136
    %1183 = vmatprep.subr.mxu0 %v1133
    %1184 = vmatpush1.msra.mxu0 %v1132
    %1185 = vmatprep.subr.mxu0 %v1129
    %1186 = vmatpush1.msra.mxu0 %v1128
    %1187 = vmatprep.subr.mxu0 %v1125
    %1188 = vmatpush1.msra.mxu0 %v1124
    %1189 = vmatprep.subr.mxu0 %v1121
    %1190 = vmatpush1.msra.mxu0 %v1120
    %1191 = vmatprep.subr.mxu0 0.0
    %1192 = vmatpush2.msra.mxu0 0.0
    %1193 = vmatprep.subr.mxu0 0.0
    %1194 = vmatpush2.msra.mxu0 0.0
    %1195 = vmatprep.subr.mxu0 0.0
    %1196 = vmatpush2.msra.mxu0 0.0
    %1197 = vmatprep.subr.mxu0 0.0
    %1198 = vmatpush2.msra.mxu0 0.0
    %1199 = vmatprep.subr.mxu0 0.0
    %1200 = vmatpush2.msra.mxu0 0.0
    %1201 = vmatprep.subr.mxu0 0.0
    %1202 = vmatpush2.msra.mxu0 0.0
    %1203 = vmatprep.subr.mxu0 0.0
    %1204 = vmatpush2.msra.mxu0 0.0
    %1205 = vmatprep.subr.mxu0 0.0
    %1206 = vmatpush2.msra.mxu0 0.0
    %1207 = vmatprep.subr.mxu0 0.0
    %1208 = vmatpush2.msra.mxu0 0.0
    %1209 = vmatprep.subr.mxu0 0.0
    %1210 = vmatpush2.msra.mxu0 0.0
    %1211 = vmatprep.subr.mxu0 0.0
    %1212 = vmatpush2.msra.mxu0 0.0
    %1213 = vmatprep.subr.mxu0 0.0
    %1214 = vmatpush2.msra.mxu0 0.0
    %1215 = vmatprep.subr.mxu0 0.0
    %1216 = vmatpush2.msra.mxu0 0.0
    %1217 = vmatprep.subr.mxu0 0.0
    %1218 = vmatpush2.msra.mxu0 0.0
    %1219 = vmatprep.subr.mxu0 0.0
    %1220 = vmatpush2.msra.mxu0 0.0
    %1221 = vmatprep.subr.mxu0 0.0
    %1222 = vmatpush2.msra.mxu0 0.0
    %1223 = vmatprep.mubr.f32.mxu0 0.0
    %1224 = vmatmul.mubr.f32.gmra.mxu0 %v1157
    %v1225 = vpop.f32.mrf.mxu0
    %v1226 = vadd.f32 0.0, %v1225
    %v1227 = vpop.f32.mrf.mxu0
    %v1228 = vadd.f32 0.0, %v1227
    %1229 = vdwg.mxu0
    %1230 = vmatprep.subr.mxu0 0.0
    %1231 = vmatpush1.msra.mxu0 0.0
    %1232 = vmatprep.subr.mxu0 0.0
    %1233 = vmatpush1.msra.mxu0 0.0
    %1234 = vmatprep.subr.mxu0 0.0
    %1235 = vmatpush1.msra.mxu0 0.0
    %1236 = vmatprep.subr.mxu0 0.0
    %1237 = vmatpush1.msra.mxu0 0.0
    %1238 = vmatprep.subr.mxu0 0.0
    %1239 = vmatpush1.msra.mxu0 0.0
    %1240 = vmatprep.subr.mxu0 0.0
    %1241 = vmatpush1.msra.mxu0 0.0
    %1242 = vmatprep.subr.mxu0 0.0
    %1243 = vmatpush1.msra.mxu0 0.0
    %1244 = vmatprep.subr.mxu0 %v1155
    %1245 = vmatpush1.msra.mxu0 %v1154
    %1246 = vmatprep.subr.mxu0 %v1151
    %1247 = vmatpush1.msra.mxu0 %v1150
    %1248 = vmatprep.subr.mxu0 %v1147
    %1249 = vmatpush1.msra.mxu0 %v1146
    %1250 = vmatprep.subr.mxu0 %v1143
    %1251 = vmatpush1.msra.mxu0 %v1142
    %1252 = vmatprep.subr.mxu0 %v1139
    %1253 = vmatpush1.msra.mxu0 %v1138
    %1254 = vmatprep.subr.mxu0 %v1135
    %1255 = vmatpush1.msra.mxu0 %v1134
    %1256 = vmatprep.subr.mxu0 %v1131
    %1257 = vmatpush1.msra.mxu0 %v1130
    %1258 = vmatprep.subr.mxu0 %v1127
    %1259 = vmatpush1.msra.mxu0 %v1126
    %1260 = vmatprep.subr.mxu0 %v1123
    %1261 = vmatpush1.msra.mxu0 %v1122
    %1262 = vmatprep.subr.mxu0 0.0
    %1263 = vmatpush2.msra.mxu0 0.0
    %1264 = vmatprep.subr.mxu0 0.0
    %1265 = vmatpush2.msra.mxu0 0.0
    %1266 = vmatprep.subr.mxu0 0.0
    %1267 = vmatpush2.msra.mxu0 0.0
    %1268 = vmatprep.subr.mxu0 0.0
    %1269 = vmatpush2.msra.mxu0 0.0
    %1270 = vmatprep.subr.mxu0 0.0
    %1271 = vmatpush2.msra.mxu0 0.0
    %1272 = vmatprep.subr.mxu0 0.0
    %1273 = vmatpush2.msra.mxu0 0.0
    %1274 = vmatprep.subr.mxu0 0.0
    %1275 = vmatpush2.msra.mxu0 0.0
    %1276 = vmatprep.subr.mxu0 0.0
    %1277 = vmatpush2.msra.mxu0 0.0
    %1278 = vmatprep.subr.mxu0 0.0
    %1279 = vmatpush2.msra.mxu0 0.0
    %1280 = vmatprep.subr.mxu0 0.0
    %1281 = vmatpush2.msra.mxu0 0.0
    %1282 = vmatprep.subr.mxu0 0.0
    %1283 = vmatpush2.msra.mxu0 0.0
    %1284 = vmatprep.subr.mxu0 0.0
    %1285 = vmatpush2.msra.mxu0 0.0
    %1286 = vmatprep.subr.mxu0 0.0
    %1287 = vmatpush2.msra.mxu0 0.0
    %1288 = vmatprep.subr.mxu0 0.0
    %1289 = vmatpush2.msra.mxu0 0.0
    %1290 = vmatprep.subr.mxu0 0.0
    %1291 = vmatpush2.msra.mxu0 0.0
    %1292 = vmatprep.subr.mxu0 0.0
    %1293 = vmatpush2.msra.mxu0 0.0
    %1294 = vmatprep.mubr.f32.mxu0 0.0
    %1295 = vmatmul.mubr.f32.gmra.mxu0 %v1157
    %v1296 = vpop.f32.mrf.mxu0
    %v1297 = vadd.f32 0.0, %v1296
    %v1298 = vpop.f32.mrf.mxu0
    %v1299 = vadd.f32 0.0, %v1298
    %1300 = vdwg.mxu0
    %v1301 = vadd.f32 %v1226, %v1228
    %1302 = vadd.xlane.f32.xlu0 %v1301
    %v1303 = vpop.xlane.xlu0 %1302
    %v1304 = vmul.f32 %v1303, 0.00390625
    %v1305 = vmul.f32 %v1226, %v1226
    %v1306 = vmul.f32 %v1228, %v1228
    %v1307 = vadd.f32 %v1305, %v1306
    %1308 = vadd.xlane.f32.xlu0 %v1307
    %v1309 = vpop.xlane.xlu0 %1308
    %v1310 = vmul.f32 %v1309, 0.00390625
    %v1311 = vmul.f32 %v1304, %v1304
    %v1312 = vsub.f32 %v1310, %v1311
    %v1313 = vmax.f32 %v1312, 0.0
    %v1314 = vsub.f32 %v1226, %v1304
    %v1315 = vsub.f32 %v1228, %v1304
    %v1316 = vadd.f32 %v1313, 1e-05
    %v1317 = vrsqrt.pop %v1316
    %v1318 = vmul.f32 %v1314, %v1317
    %v1319 = vmul.f32 %v1315, %v1317
    %1320 = vset.pattern.permute.xlu0 2
    %1321 = vperm.xlu0 %1320, %v60
    %v1322 = vpop.permute.xlu0 %1321
    %v1324 = vmul.f32 %v1318, %v1322
    %v1325 = vmul.f32 %v1319, %v1322
    %1326 = vset.pattern.permute.xlu0 3
    %1327 = vperm.xlu0 %1326, %v60
    %v1328 = vpop.permute.xlu0 %1327
    %v1330 = vadd.f32 %v1324, %v1328
    %v1331 = vadd.f32 %v1325, %v1328
    %vm1332 = vcmp.ge.f32.partialorder %v1330, 0.0
    %vm1333 = vcmp.ge.f32.partialorder %v1331, 0.0
    %v1334 = vmul.f32 %v1330, 0.2
    %v1335 = vmul.f32 %v1331, 0.2
    %v1336 = vsel %vm1332, %v1330, %v1334
    %v1337 = vsel %vm1333, %v1331, %v1335
    %1338 = vst [vmem:[#allocation11] sm:$0xff] %v1336
    %1339 = vst [vmem:[#allocation11 + $0x8] sm:$0xff] %v1337
    %v1340 = vadd.f32 %v1297, %v1299
    %1341 = vadd.xlane.f32.xlu0 %v1340
    %v1342 = vpop.xlane.xlu0 %1341
    %v1343 = vmul.f32 %v1342, 0.00390625
    %v1344 = vmul.f32 %v1297, %v1297
    %v1345 = vmul.f32 %v1299, %v1299
    %v1346 = vadd.f32 %v1344, %v1345
    %1347 = vadd.xlane.f32.xlu0 %v1346
    %v1348 = vpop.xlane.xlu0 %1347
    %v1349 = vmul.f32 %v1348, 0.00390625
    %v1350 = vmul.f32 %v1343, %v1343
    %v1351 = vsub.f32 %v1349, %v1350
    %v1352 = vmax.f32 %v1351, 0.0
    %v1353 = vsub.f32 %v1297, %v1343
    %v1354 = vsub.f32 %v1299, %v1343
    %v1355 = vadd.f32 %v1352, 1e-05
    %v1356 = vrsqrt.pop %v1355
    %v1357 = vmul.f32 %v1353, %v1356
    %v1358 = vmul.f32 %v1354, %v1356
    %v1359 = vmul.f32 %v1357, %v1322
    %v1360 = vmul.f32 %v1358, %v1322
    %v1361 = vadd.f32 %v1359, %v1328
    %v1362 = vadd.f32 %v1360, %v1328
    %vm1363 = vcmp.ge.f32.partialorder %v1361, 0.0
    %vm1364 = vcmp.ge.f32.partialorder %v1362, 0.0
    %v1365 = vmul.f32 %v1361, 0.2
    %v1366 = vmul.f32 %v1362, 0.2
    %v1367 = vsel %vm1363, %v1361, %v1365
    %v1368 = vsel %vm1364, %v1362, %v1366
    %s1369 = scalar_lea.vmem [#allocation11], 16
    %1370 = vst [vmem:[%s1369] sm:$0xff] %v1367
    %1371 = vst [vmem:[%s1369 + $0x8] sm:$0xff] %v1368
    // Predicated region
    $region34: #{tpu_custom_call.1} parent=1 // pred_check
      _
    $region35: #{tpu_custom_call.1} parent=1 // pred_check_branch
      %1373 = sbr.rel (0) target = $region37
    $region36: #{tpu_custom_call.1} parent=1 // pred_region
      %s1375 = ssub.s32 512, 512
      %1376 = vsyncadd [#allocation7], %s1375
      %s1377 = sshll.u32 [#allocation11], 4
      %s1378 = int_to_ptr.vmem [resolvable:$true] %s1377
      %1383 = dma.vmem_to_hbm [thread:$0]  %s1378, 512, %s5, [#allocation7], 256, 256, 16
    $region37: #{tpu_custom_call.1} parent=1 // pred_fallthru
      _
    // Predicated region
    $region38: #{tpu_custom_call.1} parent=1 // pred_check
      _
    $region39: #{tpu_custom_call.1} parent=1 // pred_check_branch
      %1385 = sbr.rel (0) target = $region41
    $region40: #{tpu_custom_call.1} parent=1 // pred_region
      %1386 = dma.done [#allocation7], 512
    $region41: #{tpu_custom_call.1} parent=1 // pred_fallthru
      _
    %1387 = vsyncpa [#allocation6], 1
    %1388 = vsyncpa [#allocation9], 1
    %1389 = vsyncpa [#allocation7], 1

</llo_original>
